<compile_context>
chip_gen: v5e
topology: v5e:2x2
jax: 0.10.0
libtpu: 0.0.40
codegen_flags: <defaults>
</compile_context>

<pallas_src>
import functools

import jax
import jax.numpy as jnp
from jax import lax
from jax.experimental import pallas as pl
from jax.experimental.pallas import tpu as pltpu

# ----------------------------------------------------------------------------
# Model hyperparameters.
# NOTE: in the PyTorch module, time_emb is hardcoded to nn.Embedding(1000, 128)
# and tim_emb is .view()-ed to tim_emb_size, so tim_emb_size must be 128.
# Also input_size = loc_emb + 2*tim_emb while x = cat(usr_emb, loc_emb, tim_emb),
# so usr_emb_size must equal tim_emb_size (=128) for the module to be runnable.
# ----------------------------------------------------------------------------
HIDDEN = 128
LOC_SIZE = 256
LOC_EMB = 64
TIM_EMB = 128
USR_SIZE = 50
USR_EMB = 128
INPUT_SIZE = USR_EMB + LOC_EMB + TIM_EMB  # 320
NUM_LAYERS = 3
TIME_CHUNK = 16  # timesteps per grid step of the recurrence kernel


def _round_up(x, m):
    return -(-x // m) * m


# ----------------------------------------------------------------------------
# Pallas kernel 1: row-tiled matmul + bias (used for the hoisted fc projection;
# lane-dense N=256 output slabs).
# ----------------------------------------------------------------------------
def matmul_bias_kernel(x_ref, w_ref, b_ref, o_ref):
    o_ref[...] = (
        jnp.dot(x_ref[...], w_ref[...], preferred_element_type=jnp.float32)
        + b_ref[...]
    ).astype(o_ref.dtype)


def matmul_bias_pallas(x, w, b, *, tm=512):
    """x: (M, K), w: (K, N), b: (1, N)  ->  (M, N) float32."""
    M, K = x.shape
    _, N = w.shape
    tm = min(tm, M)
    # Ensure at least 2 row tiles when possible so the "parallel" axis can
    # engage both v7x TensorCores; keep tm a multiple of 8.
    if M > 8 and M // tm < 2:
        tm = max(8, _round_up((M + 1) // 2, 8))
    tm = max(8, (tm // 8) * 8)
    grid_m = -(-M // tm)
    return pl.pallas_call(
        matmul_bias_kernel,
        out_shape=jax.ShapeDtypeStruct((M, N), jnp.float32),
        grid_spec=pltpu.PrefetchScalarGridSpec(
            num_scalar_prefetch=0,
            grid=(grid_m,),
            in_specs=[
                pl.BlockSpec((tm, K), lambda i: (i, 0)),
                pl.BlockSpec((K, N), lambda i: (0, 0)),
                pl.BlockSpec((1, N), lambda i: (0, 0)),
            ],
            out_specs=pl.BlockSpec((tm, N), lambda i: (i, 0)),
        ),
        compiler_params=pltpu.CompilerParams(
            dimension_semantics=("parallel",)),
    )(x, w, b)


# ----------------------------------------------------------------------------
# Pallas kernel 2: the sequential 3-layer tanh-RNN recurrence.
# Input is the precomputed layer-0 pre-activation (x_t @ Wih0 + b0), time-major,
# chunked along time, with a leading batch-tile ("parallel") grid axis.
# Output is h2 (top-layer hidden) for every timestep.
# ----------------------------------------------------------------------------
def rnn_recurrence_kernel(pre_ref, whh0_ref, w1_ref, w2_ref, b_ref,
                          out_ref, h0_scr, h1_scr, h2_scr, *, tc):
    # Reset the persistent hidden-state scratches at the first time chunk of
    # each batch tile (grid = (batch_tile, time_chunk); time is innermost).
    @pl.when(pl.program_id(1) == 0)
    def _():
        h0_scr[...] = jnp.zeros_like(h0_scr)
        h1_scr[...] = jnp.zeros_like(h1_scr)
        h2_scr[...] = jnp.zeros_like(h2_scr)

    # Keep only bf16 weight copies resident across the unrolled time loop
    # (~40 vregs total -> fits the 64-vreg file; the previous f32 version
    # needed ~80 and spilled).
    whh0 = whh0_ref[...]          # (H, H)      bf16
    w1 = w1_ref[...]              # (2H, H)     bf16  [Wih1^T; Whh1^T]
    w2 = w2_ref[...]              # (2H, H)     bf16  [Wih2^T; Whh2^T]
    b1 = b_ref[0:1, :]            # (1, H)      f32
    b2 = b_ref[1:2, :]            # (1, H)      f32

    bf16 = jnp.bfloat16
    f32 = jnp.float32

    def step(t, carry):
        h0, h1, h2 = carry        # (bt, H) f32
        pre_t = pre_ref[t]        # (bt, H) f32 precomputed x_t @ Wih0 + b0
        h0n = jnp.tanh(pre_t + jnp.dot(h0.astype(bf16), whh0,
                                       preferred_element_type=f32))
        x1 = jnp.concatenate([h0n, h1], axis=-1).astype(bf16)   # (bt, 2H)
        h1n = jnp.tanh(jnp.dot(x1, w1, preferred_element_type=f32) + b1)
        x2 = jnp.concatenate([h1n, h2], axis=-1).astype(bf16)
        h2n = jnp.tanh(jnp.dot(x2, w2, preferred_element_type=f32) + b2)
        out_ref[t] = h2n.astype(out_ref.dtype)
        return (h0n, h1n, h2n)

    carry0 = (h0_scr[...], h1_scr[...], h2_scr[...])
    h0f, h1f, h2f = lax.fori_loop(0, tc, step, carry0, unroll=True)
    # NOTE: padded trailing timesteps (T_pad > T) update these scratches with
    # dummy values; harmless because the module's forward never returns the
    # final hidden state and padded outputs are sliced off by the wrapper.
    h0_scr[...] = h0f
    h1_scr[...] = h1f
    h2_scr[...] = h2f


def rnn_recurrence_pallas(pre_tm, params, *, tc=TIME_CHUNK, bt=None):
    """pre_tm: (T_pad, B, H) time-major pre-activations. Returns (T_pad, B, H)."""
    T_pad, B, H = pre_tm.shape
    assert T_pad % tc == 0
    if bt is None:
        # Split the batch into two independent tiles (one per v7x TensorCore)
        # when it is large enough; otherwise run the whole batch in one tile.
        bt = B // 2 if (B >= 16 and (B // 2) % 8 == 0) else B
    assert B % bt == 0

    def const(shape):
        return pl.BlockSpec(shape, lambda b, c: tuple(0 for _ in shape))

    grid_spec = pltpu.PrefetchScalarGridSpec(
        num_scalar_prefetch=0,
        grid=(B // bt, T_pad // tc),
        in_specs=[
            pl.BlockSpec((tc, bt, H), lambda b, c: (c, b, 0)),   # pre-activations
            const((H, H)),                                       # Whh0^T    bf16
            const((2 * H, H)),                                   # fused l1  bf16
            const((2 * H, H)),                                   # fused l2  bf16
            const((2, H)),                                       # biases l1,l2
        ],
        out_specs=pl.BlockSpec((tc, bt, H), lambda b, c: (c, b, 0)),
        scratch_shapes=[pltpu.VMEM((bt, H), jnp.float32)] * 3,
    )

    return pl.pallas_call(
        functools.partial(rnn_recurrence_kernel, tc=tc),
        out_shape=jax.ShapeDtypeStruct((T_pad, B, H), jnp.float32),
        grid_spec=grid_spec,
        compiler_params=pltpu.CompilerParams(
            dimension_semantics=("parallel", "arbitrary")),  # batch || , time seq
    )(pre_tm, params["whh0_bf16"], params["w1_bf16"], params["w2_bf16"],
      params["b12"])


# ----------------------------------------------------------------------------
# Deterministic parameter initialization (mirrors the module's __init__).
# ----------------------------------------------------------------------------
def xavier_uniform(key, shape):
    fan_out, fan_in = shape
    limit = jnp.sqrt(6.0 / (fan_in + fan_out))
    return jax.random.uniform(key, shape, jnp.float32, -limit, limit)


def orthogonal(key, n):
    a = jax.random.normal(key, (n, n), jnp.float32)
    q, r = jnp.linalg.qr(a)
    return q * jnp.sign(jnp.diag(r))[None, :]


def init_params(key):
    ks = jax.random.split(key, 16)
    p = {}
    # Embedding tables (padding_idx=0 -> row 0 is zero).
    emb_loc = jax.random.normal(ks[0], (LOC_SIZE, LOC_EMB), jnp.float32)
    p["emb_loc"] = emb_loc.at[0].set(0.0)
    time_emb = jax.random.normal(ks[1], (1000, 128), jnp.float32)
    p["time_emb"] = time_emb.at[0].set(0.0)
    emb_usr = jax.random.normal(ks[2], (USR_SIZE, USR_EMB), jnp.float32)
    p["emb_usr"] = emb_usr.at[0].set(0.0)

    # RNN weights: weight_ih xavier_uniform, weight_hh orthogonal, biases zero
    # (as in init_weights). Stored pre-transposed (in_features, out_features),
    # with layers 1/2 ih/hh stacked into a single fused (2H, H) weight.
    p["wih0_T"] = xavier_uniform(ks[3], (HIDDEN, INPUT_SIZE)).T      # (320, 128)
    p["whh0_T"] = orthogonal(ks[6], HIDDEN).T                        # (128, 128)
    wih1_T = xavier_uniform(ks[4], (HIDDEN, HIDDEN)).T
    whh1_T = orthogonal(ks[7], HIDDEN).T
    wih2_T = xavier_uniform(ks[5], (HIDDEN, HIDDEN)).T
    whh2_T = orthogonal(ks[8], HIDDEN).T
    p["w1_fused"] = jnp.concatenate([wih1_T, whh1_T], axis=0)        # (256, 128)
    p["w2_fused"] = jnp.concatenate([wih2_T, whh2_T], axis=0)        # (256, 128)
    # b_ih + b_hh per layer (all zero after nn.init.constant_(t, 0)).
    p["b0"] = jnp.zeros((1, HIDDEN), jnp.float32)
    p["b12"] = jnp.zeros((2, HIDDEN), jnp.float32)

    # fc (created after init_weights in PyTorch -> default Linear init).
    lim = 1.0 / jnp.sqrt(HIDDEN)
    p["wfc_T"] = jax.random.uniform(
        ks[9], (LOC_SIZE, HIDDEN), jnp.float32, -lim, lim).T         # (128, 256)
    p["bfc"] = jax.random.uniform(
        ks[10], (1, LOC_SIZE), jnp.float32, -lim, lim)
    return p


def prepare_params(p):
    """Kernel-ready parameters: fold W_ih_l0 (and b0) into the embedding tables
    and cast the recurrence weights to bf16."""
    q = {}
    wih0 = p["wih0_T"]                                   # (320, 128) f32
    w_usr = wih0[:USR_EMB]                               # x = cat(usr, loc, tim)
    w_loc = wih0[USR_EMB:USR_EMB + LOC_EMB]
    w_tim = wih0[USR_EMB + LOC_EMB:]
    # b0 is folded into the user table (it applies at every timestep).
    q["pre_usr"] = p["emb_usr"] @ w_usr + p["b0"]        # (50,   128)
    q["pre_loc"] = p["emb_loc"] @ w_loc                  # (256,  128)
    q["pre_tim"] = p["time_emb"] @ w_tim                 # (1000, 128)

    q["whh0_bf16"] = p["whh0_T"].astype(jnp.bfloat16)
    q["w1_bf16"] = p["w1_fused"].astype(jnp.bfloat16)
    q["w2_bf16"] = p["w2_fused"].astype(jnp.bfloat16)
    q["b12"] = p["b12"]
    q["wfc_T"] = p["wfc_T"]
    q["bfc"] = p["bfc"]
    return q


# ----------------------------------------------------------------------------
# Forward pass:
#   folded-embedding gathers (time-major) -> layer-0 pre-activation  (XLA glue)
#   -> Pallas recurrence kernel (batch-parallel, time-chunked sequential)
#   -> Pallas fc matmul (lane-dense N=256)
# ----------------------------------------------------------------------------
def layer0_preact_time_major(qparams, user, loc, tim):
    """(T, B, H) layer-0 pre-activation = x_t @ W_ih_l0 + b0 via folded tables."""
    tim_idx = (tim * 1000.0).astype(jnp.int32)
    return (qparams["pre_usr"][user.T]
            + qparams["pre_loc"][loc.T]
            + qparams["pre_tim"][tim_idx.T])


def rnn_poi_forward(qparams, user, loc, tim, origin_len=None):
    # user, loc: (B, T) int32; tim: (B, T) float32 in [0, 1).
    B, T = loc.shape
    pre_tm = layer0_preact_time_major(qparams, user, loc, tim)   # (T, B, H)

    # Pad time to a multiple of the chunk size (padded outputs are sliced
    # away; the final hidden state is never returned, matching PyTorch).
    T_pad = _round_up(T, TIME_CHUNK)
    if T_pad != T:
        pre_tm = jnp.pad(pre_tm, ((0, T_pad - T), (0, 0), (0, 0)))

    h2_tm = rnn_recurrence_pallas(pre_tm, qparams)[:T]           # (T, B, H)
    h2 = jnp.transpose(h2_tm, (1, 0, 2)).reshape(B * T, HIDDEN)  # batch-first

    out = matmul_bias_pallas(h2, qparams["wfc_T"], qparams["bfc"])
    return out.reshape(B, T, LOC_SIZE)


# ----------------------------------------------------------------------------
# References for correctness checking.
# ----------------------------------------------------------------------------
def rnn_poi_reference_f32(p, user, loc, tim):
    """Module-faithful full-f32 reference."""
    B, T = loc.shape
    loc_emb = p["emb_loc"][loc]
    tim_idx = (tim * 1000.0).astype(jnp.int32)
    tim_emb = p["time_emb"][tim_idx]
    user_emb = p["emb_usr"][user]
    x = jnp.concatenate((user_emb, loc_emb, tim_emb), axis=2)    # (B, T, 320)

    wih0, whh0 = p["wih0_T"], p["whh0_T"]
    wih1, whh1 = p["w1_fused"][:HIDDEN], p["w1_fused"][HIDDEN:]
    wih2, whh2 = p["w2_fused"][:HIDDEN], p["w2_fused"][HIDDEN:]
    b0, b1, b2 = p["b0"][0], p["b12"][0], p["b12"][1]

    def step(h, x_t):
        h0 = jnp.tanh(x_t @ wih0 + h[0] @ whh0 + b0)
        h1 = jnp.tanh(h0 @ wih1 + h[1] @ whh1 + b1)
        h2 = jnp.tanh(h1 @ wih2 + h[2] @ whh2 + b2)
        return jnp.stack([h0, h1, h2]), h2

    h = jnp.zeros((NUM_LAYERS, B, HIDDEN), jnp.float32)
    _, out_tm = lax.scan(step, h, jnp.transpose(x, (1, 0, 2)))
    out = jnp.transpose(out_tm, (1, 0, 2))                       # (B, T, H)
    return out @ p["wfc_T"] + p["bfc"][0]


def rnn_poi_reference_matched(qparams, user, loc, tim):
    """Same math / same precision (bf16 weights, f32 accumulate) as the kernel."""
    B, T = loc.shape
    pre_tm = layer0_preact_time_major(qparams, user, loc, tim)   # (T, B, H)
    whh0, w1, w2 = qparams["whh0_bf16"], qparams["w1_bf16"], qparams["w2_bf16"]
    b1, b2 = qparams["b12"][0:1], qparams["b12"][1:2]
    bf16, f32 = jnp.bfloat16, jnp.float32

    def step(h, pre_t):
        h0, h1, h2 = h
        h0n = jnp.tanh(pre_t + jnp.dot(h0.astype(bf16), whh0,
                                       preferred_element_type=f32))
        x1 = jnp.concatenate([h0n, h1], axis=-1).astype(bf16)
        h1n = jnp.tanh(jnp.dot(x1, w1, preferred_element_type=f32) + b1)
        x2 = jnp.concatenate([h1n, h2], axis=-1).astype(bf16)
        h2n = jnp.tanh(jnp.dot(x2, w2, preferred_element_type=f32) + b2)
        return (h0n, h1n, h2n), h2n

    init = tuple(jnp.zeros((B, HIDDEN), jnp.float32) for _ in range(3))
    _, h2_tm = lax.scan(step, init, pre_tm)
    out = jnp.transpose(h2_tm, (1, 0, 2)) @ qparams["wfc_T"] + qparams["bfc"][0]
    return out


if __name__ == "__main__":
    root = jax.random.PRNGKey(0)
    kp, ku, kl, kt = jax.random.split(root, 4)
    raw_params = init_params(kp)
    params = prepare_params(raw_params)

    B, T = 8, 16  # B >= 8 for full f32 sublane occupancy
    user = jax.random.randint(ku, (B, T), 1, USR_SIZE, dtype=jnp.int32)
    loc = jax.random.randint(kl, (B, T), 1, LOC_SIZE, dtype=jnp.int32)
    tim = jax.random.uniform(kt, (B, T), jnp.float32, 0.0, 0.999)
    origin_len = jnp.full((B,), T, jnp.int32)  # unused by forward (as in PyTorch)

    out = jax.block_until_ready(
        rnn_poi_forward(params, user, loc, tim, origin_len))
    assert out.shape == (B, T, LOC_SIZE), out.shape

    # 1) Kernel correctness vs. a precision-matched (bf16-weight) reference.
    ref_m = jax.block_until_ready(
        rnn_poi_reference_matched(params, user, loc, tim))
    assert jnp.allclose(out, ref_m, atol=1e-2, rtol=1e-2), (
        float(jnp.max(jnp.abs(out - ref_m))))

    # 2) Module fidelity vs. the full-f32 reference (bf16 recurrence weights
    #    -> looser tolerance).
    ref_f = jax.block_until_ready(
        rnn_poi_reference_f32(raw_params, user, loc, tim))
    assert jnp.allclose(out, ref_f, atol=2.5e-1, rtol=2.5e-1), (
        float(jnp.max(jnp.abs(out - ref_f))))

    print("KERNEL_OK")
</pallas_src>

<mosaic_0001>
module attributes {stable_mosaic.version = 11 : i64} {
  func.func @rnn_recurrence_kernel(%arg0: i32, %arg1: i32, %arg2: memref<16x8x128xf32, #tpu.memory_space<vmem>>, %arg3: memref<128x128xbf16, #tpu.memory_space<vmem>>, %arg4: memref<256x128xbf16, #tpu.memory_space<vmem>>, %arg5: memref<256x128xbf16, #tpu.memory_space<vmem>>, %arg6: memref<2x128xf32, #tpu.memory_space<vmem>>, %arg7: memref<16x8x128xf32, #tpu.memory_space<vmem>>, %arg8: memref<8x128xf32, #tpu.memory_space<vmem>>, %arg9: memref<8x128xf32, #tpu.memory_space<vmem>>, %arg10: memref<8x128xf32, #tpu.memory_space<vmem>>) attributes {dimension_semantics = [#tpu.dimension_semantics<parallel>, #tpu.dimension_semantics<arbitrary>], iteration_bounds = array<i64: 1, 1>, scalar_prefetch = 0 : i64, scratch_operands = 3 : i64, tpu.core_type = #tpu.core_type<tc>, window_params = [{transform_indices = @transform_0, window_bounds = array<i64: 16, 8, 128>}, {pipeline_mode = #tpu.pipeline_mode<synchronous>, transform_indices = @transform_1, window_bounds = array<i64: 128, 128>}, {pipeline_mode = #tpu.pipeline_mode<synchronous>, transform_indices = @transform_2, window_bounds = array<i64: 256, 128>}, {pipeline_mode = #tpu.pipeline_mode<synchronous>, transform_indices = @transform_3, window_bounds = array<i64: 256, 128>}, {pipeline_mode = #tpu.pipeline_mode<synchronous>, transform_indices = @transform_4, window_bounds = array<i64: 2, 128>}, {transform_indices = @transform_5, window_bounds = array<i64: 16, 8, 128>}]} {
    %c0_i32 = arith.constant 0 : i32
    %0 = arith.cmpi eq, %arg1, %c0_i32 : i32
    %1 = arith.extui %0 : i1 to i32
    %c0_i32_0 = arith.constant 0 : i32
    %2 = arith.cmpi ne, %1, %c0_i32_0 : i32
    scf.if %2 {
      %cst_133 = arith.constant 0.000000e+00 : f32
      %382 = vector.broadcast %cst_133 : f32 to vector<8x128xf32>
      %c0_134 = arith.constant 0 : index
      %c0_135 = arith.constant 0 : index
      %383 = vector.load %arg8[%c0_134, %c0_135] : memref<8x128xf32, #tpu.memory_space<vmem>>, vector<8x128xf32>
      tpu.vector_store %arg8[%c0_134, %c0_135], %382 {strides = array<i32>} : memref<8x128xf32, #tpu.memory_space<vmem>>, vector<8x128xf32>,
      %cst_136 = arith.constant 0.000000e+00 : f32
      %384 = vector.broadcast %cst_136 : f32 to vector<8x128xf32>
      %c0_137 = arith.constant 0 : index
      %c0_138 = arith.constant 0 : index
      %385 = vector.load %arg9[%c0_137, %c0_138] : memref<8x128xf32, #tpu.memory_space<vmem>>, vector<8x128xf32>
      tpu.vector_store %arg9[%c0_137, %c0_138], %384 {strides = array<i32>} : memref<8x128xf32, #tpu.memory_space<vmem>>, vector<8x128xf32>,
      %cst_139 = arith.constant 0.000000e+00 : f32
      %386 = vector.broadcast %cst_139 : f32 to vector<8x128xf32>
      %c0_140 = arith.constant 0 : index
      %c0_141 = arith.constant 0 : index
      %387 = vector.load %arg10[%c0_140, %c0_141] : memref<8x128xf32, #tpu.memory_space<vmem>>, vector<8x128xf32>
      tpu.vector_store %arg10[%c0_140, %c0_141], %386 {strides = array<i32>} : memref<8x128xf32, #tpu.memory_space<vmem>>, vector<8x128xf32>,
    } else {
    }
    %c0 = arith.constant 0 : index
    %c0_1 = arith.constant 0 : index
    %3 = vector.load %arg3[%c0, %c0_1] : memref<128x128xbf16, #tpu.memory_space<vmem>>, vector<128x128xbf16>
    %c0_2 = arith.constant 0 : index
    %c0_3 = arith.constant 0 : index
    %4 = vector.load %arg4[%c0_2, %c0_3] : memref<256x128xbf16, #tpu.memory_space<vmem>>, vector<256x128xbf16>
    %c0_4 = arith.constant 0 : index
    %c0_5 = arith.constant 0 : index
    %5 = vector.load %arg5[%c0_4, %c0_5] : memref<256x128xbf16, #tpu.memory_space<vmem>>, vector<256x128xbf16>
    %c0_6 = arith.constant 0 : index
    %c0_7 = arith.constant 0 : index
    %6 = vector.load %arg6[%c0_6, %c0_7] : memref<2x128xf32, #tpu.memory_space<vmem>>, vector<1x128xf32>
    %c1 = arith.constant 1 : index
    %c0_8 = arith.constant 0 : index
    %7 = vector.load %arg6[%c1, %c0_8] : memref<2x128xf32, #tpu.memory_space<vmem>>, vector<1x128xf32>
    %c0_9 = arith.constant 0 : index
    %c0_10 = arith.constant 0 : index
    %8 = vector.load %arg8[%c0_9, %c0_10] : memref<8x128xf32, #tpu.memory_space<vmem>>, vector<8x128xf32>
    %c0_11 = arith.constant 0 : index
    %c0_12 = arith.constant 0 : index
    %9 = vector.load %arg9[%c0_11, %c0_12] : memref<8x128xf32, #tpu.memory_space<vmem>>, vector<8x128xf32>
    %c0_13 = arith.constant 0 : index
    %c0_14 = arith.constant 0 : index
    %10 = vector.load %arg10[%c0_13, %c0_14] : memref<8x128xf32, #tpu.memory_space<vmem>>, vector<8x128xf32>
    %c0_i32_15 = arith.constant 0 : i32
    %11 = arith.index_cast %c0_i32_15 : i32 to index
    %c0_16 = arith.constant 0 : index
    %c0_17 = arith.constant 0 : index
    %12 = vector.load %arg2[%11, %c0_16, %c0_17] : memref<16x8x128xf32, #tpu.memory_space<vmem>>, vector<1x8x128xf32>
    %13 = vector.shape_cast %12 : vector<1x8x128xf32> to vector<8x128xf32>
    %14 = arith.truncf %8 : vector<8x128xf32> to vector<8x128xbf16>
    %cst = arith.constant dense<0.000000e+00> : vector<8x128xf32>
    %15 = tpu.matmul %14, %3, %cst {dimension_numbers = #tpu.dot_dimension_numbers<[1], [0], [0], [1], [0, 0, 1, 1], [], []>} : vector<8x128xbf16>, vector<128x128xbf16>, vector<8x128xf32> -> vector<8x128xf32>
    %16 = arith.addf %13, %15 : vector<8x128xf32>
    %17 = math.tanh %16 : vector<8x128xf32>
    %18 = tpu.concatenate %17, %9 in 1 : vector<8x128xf32>, vector<8x128xf32> -> vector<8x256xf32>
    %19 = arith.truncf %18 : vector<8x256xf32> to vector<8x256xbf16>
    %cst_18 = arith.constant dense<0.000000e+00> : vector<8x128xf32>
    %20 = tpu.matmul %19, %4, %cst_18 {dimension_numbers = #tpu.dot_dimension_numbers<[1], [0], [0], [1], [0, 0, 1, 1], [], []>} : vector<8x256xbf16>, vector<256x128xbf16>, vector<8x128xf32> -> vector<8x128xf32>
    %21 = vector.broadcast %6 : vector<1x128xf32> to vector<8x128xf32>
    %22 = arith.addf %20, %21 : vector<8x128xf32>
    %23 = math.tanh %22 : vector<8x128xf32>
    %24 = tpu.concatenate %23, %10 in 1 : vector<8x128xf32>, vector<8x128xf32> -> vector<8x256xf32>
    %25 = arith.truncf %24 : vector<8x256xf32> to vector<8x256xbf16>
    %cst_19 = arith.constant dense<0.000000e+00> : vector<8x128xf32>
    %26 = tpu.matmul %25, %5, %cst_19 {dimension_numbers = #tpu.dot_dimension_numbers<[1], [0], [0], [1], [0, 0, 1, 1], [], []>} : vector<8x256xbf16>, vector<256x128xbf16>, vector<8x128xf32> -> vector<8x128xf32>
    %27 = vector.broadcast %7 : vector<1x128xf32> to vector<8x128xf32>
    %28 = arith.addf %26, %27 : vector<8x128xf32>
    %29 = math.tanh %28 : vector<8x128xf32>
    %30 = arith.index_cast %c0_i32_15 : i32 to index
    %c0_20 = arith.constant 0 : index
    %c0_21 = arith.constant 0 : index
    %31 = vector.load %arg7[%30, %c0_20, %c0_21] : memref<16x8x128xf32, #tpu.memory_space<vmem>>, vector<1x8x128xf32>
    %32 = vector.shape_cast %31 : vector<1x8x128xf32> to vector<8x128xf32>
    %33 = vector.shape_cast %29 : vector<8x128xf32> to vector<1x8x128xf32>
    tpu.vector_store %arg7[%30, %c0_20, %c0_21], %33 {strides = array<i32>} : memref<16x8x128xf32, #tpu.memory_space<vmem>>, vector<1x8x128xf32>,
    %c1_i32 = arith.constant 1 : i32
    %34 = arith.index_cast %c1_i32 : i32 to index
    %c0_22 = arith.constant 0 : index
    %c0_23 = arith.constant 0 : index
    %35 = vector.load %arg2[%34, %c0_22, %c0_23] : memref<16x8x128xf32, #tpu.memory_space<vmem>>, vector<1x8x128xf32>
    %36 = vector.shape_cast %35 : vector<1x8x128xf32> to vector<8x128xf32>
    %37 = arith.truncf %17 : vector<8x128xf32> to vector<8x128xbf16>
    %cst_24 = arith.constant dense<0.000000e+00> : vector<8x128xf32>
    %38 = tpu.matmul %37, %3, %cst_24 {dimension_numbers = #tpu.dot_dimension_numbers<[1], [0], [0], [1], [0, 0, 1, 1], [], []>} : vector<8x128xbf16>, vector<128x128xbf16>, vector<8x128xf32> -> vector<8x128xf32>
    %39 = arith.addf %36, %38 : vector<8x128xf32>
    %40 = math.tanh %39 : vector<8x128xf32>
    %41 = tpu.concatenate %40, %23 in 1 : vector<8x128xf32>, vector<8x128xf32> -> vector<8x256xf32>
    %42 = arith.truncf %41 : vector<8x256xf32> to vector<8x256xbf16>
    %cst_25 = arith.constant dense<0.000000e+00> : vector<8x128xf32>
    %43 = tpu.matmul %42, %4, %cst_25 {dimension_numbers = #tpu.dot_dimension_numbers<[1], [0], [0], [1], [0, 0, 1, 1], [], []>} : vector<8x256xbf16>, vector<256x128xbf16>, vector<8x128xf32> -> vector<8x128xf32>
    %44 = vector.broadcast %6 : vector<1x128xf32> to vector<8x128xf32>
    %45 = arith.addf %43, %44 : vector<8x128xf32>
    %46 = math.tanh %45 : vector<8x128xf32>
    %47 = tpu.concatenate %46, %29 in 1 : vector<8x128xf32>, vector<8x128xf32> -> vector<8x256xf32>
    %48 = arith.truncf %47 : vector<8x256xf32> to vector<8x256xbf16>
    %cst_26 = arith.constant dense<0.000000e+00> : vector<8x128xf32>
    %49 = tpu.matmul %48, %5, %cst_26 {dimension_numbers = #tpu.dot_dimension_numbers<[1], [0], [0], [1], [0, 0, 1, 1], [], []>} : vector<8x256xbf16>, vector<256x128xbf16>, vector<8x128xf32> -> vector<8x128xf32>
    %50 = vector.broadcast %7 : vector<1x128xf32> to vector<8x128xf32>
    %51 = arith.addf %49, %50 : vector<8x128xf32>
    %52 = math.tanh %51 : vector<8x128xf32>
    %53 = arith.index_cast %c1_i32 : i32 to index
    %c0_27 = arith.constant 0 : index
    %c0_28 = arith.constant 0 : index
    %54 = vector.load %arg7[%53, %c0_27, %c0_28] : memref<16x8x128xf32, #tpu.memory_space<vmem>>, vector<1x8x128xf32>
    %55 = vector.shape_cast %54 : vector<1x8x128xf32> to vector<8x128xf32>
    %56 = vector.shape_cast %52 : vector<8x128xf32> to vector<1x8x128xf32>
    tpu.vector_store %arg7[%53, %c0_27, %c0_28], %56 {strides = array<i32>} : memref<16x8x128xf32, #tpu.memory_space<vmem>>, vector<1x8x128xf32>,
    %c2_i32 = arith.constant 2 : i32
    %57 = arith.index_cast %c2_i32 : i32 to index
    %c0_29 = arith.constant 0 : index
    %c0_30 = arith.constant 0 : index
    %58 = vector.load %arg2[%57, %c0_29, %c0_30] : memref<16x8x128xf32, #tpu.memory_space<vmem>>, vector<1x8x128xf32>
    %59 = vector.shape_cast %58 : vector<1x8x128xf32> to vector<8x128xf32>
    %60 = arith.truncf %40 : vector<8x128xf32> to vector<8x128xbf16>
    %cst_31 = arith.constant dense<0.000000e+00> : vector<8x128xf32>
    %61 = tpu.matmul %60, %3, %cst_31 {dimension_numbers = #tpu.dot_dimension_numbers<[1], [0], [0], [1], [0, 0, 1, 1], [], []>} : vector<8x128xbf16>, vector<128x128xbf16>, vector<8x128xf32> -> vector<8x128xf32>
    %62 = arith.addf %59, %61 : vector<8x128xf32>
    %63 = math.tanh %62 : vector<8x128xf32>
    %64 = tpu.concatenate %63, %46 in 1 : vector<8x128xf32>, vector<8x128xf32> -> vector<8x256xf32>
    %65 = arith.truncf %64 : vector<8x256xf32> to vector<8x256xbf16>
    %cst_32 = arith.constant dense<0.000000e+00> : vector<8x128xf32>
    %66 = tpu.matmul %65, %4, %cst_32 {dimension_numbers = #tpu.dot_dimension_numbers<[1], [0], [0], [1], [0, 0, 1, 1], [], []>} : vector<8x256xbf16>, vector<256x128xbf16>, vector<8x128xf32> -> vector<8x128xf32>
    %67 = vector.broadcast %6 : vector<1x128xf32> to vector<8x128xf32>
    %68 = arith.addf %66, %67 : vector<8x128xf32>
    %69 = math.tanh %68 : vector<8x128xf32>
    %70 = tpu.concatenate %69, %52 in 1 : vector<8x128xf32>, vector<8x128xf32> -> vector<8x256xf32>
    %71 = arith.truncf %70 : vector<8x256xf32> to vector<8x256xbf16>
    %cst_33 = arith.constant dense<0.000000e+00> : vector<8x128xf32>
    %72 = tpu.matmul %71, %5, %cst_33 {dimension_numbers = #tpu.dot_dimension_numbers<[1], [0], [0], [1], [0, 0, 1, 1], [], []>} : vector<8x256xbf16>, vector<256x128xbf16>, vector<8x128xf32> -> vector<8x128xf32>
    %73 = vector.broadcast %7 : vector<1x128xf32> to vector<8x128xf32>
    %74 = arith.addf %72, %73 : vector<8x128xf32>
    %75 = math.tanh %74 : vector<8x128xf32>
    %76 = arith.index_cast %c2_i32 : i32 to index
    %c0_34 = arith.constant 0 : index
    %c0_35 = arith.constant 0 : index
    %77 = vector.load %arg7[%76, %c0_34, %c0_35] : memref<16x8x128xf32, #tpu.memory_space<vmem>>, vector<1x8x128xf32>
    %78 = vector.shape_cast %77 : vector<1x8x128xf32> to vector<8x128xf32>
    %79 = vector.shape_cast %75 : vector<8x128xf32> to vector<1x8x128xf32>
    tpu.vector_store %arg7[%76, %c0_34, %c0_35], %79 {strides = array<i32>} : memref<16x8x128xf32, #tpu.memory_space<vmem>>, vector<1x8x128xf32>,
    %c3_i32 = arith.constant 3 : i32
    %80 = arith.index_cast %c3_i32 : i32 to index
    %c0_36 = arith.constant 0 : index
    %c0_37 = arith.constant 0 : index
    %81 = vector.load %arg2[%80, %c0_36, %c0_37] : memref<16x8x128xf32, #tpu.memory_space<vmem>>, vector<1x8x128xf32>
    %82 = vector.shape_cast %81 : vector<1x8x128xf32> to vector<8x128xf32>
    %83 = arith.truncf %63 : vector<8x128xf32> to vector<8x128xbf16>
    %cst_38 = arith.constant dense<0.000000e+00> : vector<8x128xf32>
    %84 = tpu.matmul %83, %3, %cst_38 {dimension_numbers = #tpu.dot_dimension_numbers<[1], [0], [0], [1], [0, 0, 1, 1], [], []>} : vector<8x128xbf16>, vector<128x128xbf16>, vector<8x128xf32> -> vector<8x128xf32>
    %85 = arith.addf %82, %84 : vector<8x128xf32>
    %86 = math.tanh %85 : vector<8x128xf32>
    %87 = tpu.concatenate %86, %69 in 1 : vector<8x128xf32>, vector<8x128xf32> -> vector<8x256xf32>
    %88 = arith.truncf %87 : vector<8x256xf32> to vector<8x256xbf16>
    %cst_39 = arith.constant dense<0.000000e+00> : vector<8x128xf32>
    %89 = tpu.matmul %88, %4, %cst_39 {dimension_numbers = #tpu.dot_dimension_numbers<[1], [0], [0], [1], [0, 0, 1, 1], [], []>} : vector<8x256xbf16>, vector<256x128xbf16>, vector<8x128xf32> -> vector<8x128xf32>
    %90 = vector.broadcast %6 : vector<1x128xf32> to vector<8x128xf32>
    %91 = arith.addf %89, %90 : vector<8x128xf32>
    %92 = math.tanh %91 : vector<8x128xf32>
    %93 = tpu.concatenate %92, %75 in 1 : vector<8x128xf32>, vector<8x128xf32> -> vector<8x256xf32>
    %94 = arith.truncf %93 : vector<8x256xf32> to vector<8x256xbf16>
    %cst_40 = arith.constant dense<0.000000e+00> : vector<8x128xf32>
    %95 = tpu.matmul %94, %5, %cst_40 {dimension_numbers = #tpu.dot_dimension_numbers<[1], [0], [0], [1], [0, 0, 1, 1], [], []>} : vector<8x256xbf16>, vector<256x128xbf16>, vector<8x128xf32> -> vector<8x128xf32>
    %96 = vector.broadcast %7 : vector<1x128xf32> to vector<8x128xf32>
    %97 = arith.addf %95, %96 : vector<8x128xf32>
    %98 = math.tanh %97 : vector<8x128xf32>
    %99 = arith.index_cast %c3_i32 : i32 to index
    %c0_41 = arith.constant 0 : index
    %c0_42 = arith.constant 0 : index
    %100 = vector.load %arg7[%99, %c0_41, %c0_42] : memref<16x8x128xf32, #tpu.memory_space<vmem>>, vector<1x8x128xf32>
    %101 = vector.shape_cast %100 : vector<1x8x128xf32> to vector<8x128xf32>
    %102 = vector.shape_cast %98 : vector<8x128xf32> to vector<1x8x128xf32>
    tpu.vector_store %arg7[%99, %c0_41, %c0_42], %102 {strides = array<i32>} : memref<16x8x128xf32, #tpu.memory_space<vmem>>, vector<1x8x128xf32>,
    %c4_i32 = arith.constant 4 : i32
    %103 = arith.index_cast %c4_i32 : i32 to index
    %c0_43 = arith.constant 0 : index
    %c0_44 = arith.constant 0 : index
    %104 = vector.load %arg2[%103, %c0_43, %c0_44] : memref<16x8x128xf32, #tpu.memory_space<vmem>>, vector<1x8x128xf32>
    %105 = vector.shape_cast %104 : vector<1x8x128xf32> to vector<8x128xf32>
    %106 = arith.truncf %86 : vector<8x128xf32> to vector<8x128xbf16>
    %cst_45 = arith.constant dense<0.000000e+00> : vector<8x128xf32>
    %107 = tpu.matmul %106, %3, %cst_45 {dimension_numbers = #tpu.dot_dimension_numbers<[1], [0], [0], [1], [0, 0, 1, 1], [], []>} : vector<8x128xbf16>, vector<128x128xbf16>, vector<8x128xf32> -> vector<8x128xf32>
    %108 = arith.addf %105, %107 : vector<8x128xf32>
    %109 = math.tanh %108 : vector<8x128xf32>
    %110 = tpu.concatenate %109, %92 in 1 : vector<8x128xf32>, vector<8x128xf32> -> vector<8x256xf32>
    %111 = arith.truncf %110 : vector<8x256xf32> to vector<8x256xbf16>
    %cst_46 = arith.constant dense<0.000000e+00> : vector<8x128xf32>
    %112 = tpu.matmul %111, %4, %cst_46 {dimension_numbers = #tpu.dot_dimension_numbers<[1], [0], [0], [1], [0, 0, 1, 1], [], []>} : vector<8x256xbf16>, vector<256x128xbf16>, vector<8x128xf32> -> vector<8x128xf32>
    %113 = vector.broadcast %6 : vector<1x128xf32> to vector<8x128xf32>
    %114 = arith.addf %112, %113 : vector<8x128xf32>
    %115 = math.tanh %114 : vector<8x128xf32>
    %116 = tpu.concatenate %115, %98 in 1 : vector<8x128xf32>, vector<8x128xf32> -> vector<8x256xf32>
    %117 = arith.truncf %116 : vector<8x256xf32> to vector<8x256xbf16>
    %cst_47 = arith.constant dense<0.000000e+00> : vector<8x128xf32>
    %118 = tpu.matmul %117, %5, %cst_47 {dimension_numbers = #tpu.dot_dimension_numbers<[1], [0], [0], [1], [0, 0, 1, 1], [], []>} : vector<8x256xbf16>, vector<256x128xbf16>, vector<8x128xf32> -> vector<8x128xf32>
    %119 = vector.broadcast %7 : vector<1x128xf32> to vector<8x128xf32>
    %120 = arith.addf %118, %119 : vector<8x128xf32>
    %121 = math.tanh %120 : vector<8x128xf32>
    %122 = arith.index_cast %c4_i32 : i32 to index
    %c0_48 = arith.constant 0 : index
    %c0_49 = arith.constant 0 : index
    %123 = vector.load %arg7[%122, %c0_48, %c0_49] : memref<16x8x128xf32, #tpu.memory_space<vmem>>, vector<1x8x128xf32>
    %124 = vector.shape_cast %123 : vector<1x8x128xf32> to vector<8x128xf32>
    %125 = vector.shape_cast %121 : vector<8x128xf32> to vector<1x8x128xf32>
    tpu.vector_store %arg7[%122, %c0_48, %c0_49], %125 {strides = array<i32>} : memref<16x8x128xf32, #tpu.memory_space<vmem>>, vector<1x8x128xf32>,
    %c5_i32 = arith.constant 5 : i32
    %126 = arith.index_cast %c5_i32 : i32 to index
    %c0_50 = arith.constant 0 : index
    %c0_51 = arith.constant 0 : index
    %127 = vector.load %arg2[%126, %c0_50, %c0_51] : memref<16x8x128xf32, #tpu.memory_space<vmem>>, vector<1x8x128xf32>
    %128 = vector.shape_cast %127 : vector<1x8x128xf32> to vector<8x128xf32>
    %129 = arith.truncf %109 : vector<8x128xf32> to vector<8x128xbf16>
    %cst_52 = arith.constant dense<0.000000e+00> : vector<8x128xf32>
    %130 = tpu.matmul %129, %3, %cst_52 {dimension_numbers = #tpu.dot_dimension_numbers<[1], [0], [0], [1], [0, 0, 1, 1], [], []>} : vector<8x128xbf16>, vector<128x128xbf16>, vector<8x128xf32> -> vector<8x128xf32>
    %131 = arith.addf %128, %130 : vector<8x128xf32>
    %132 = math.tanh %131 : vector<8x128xf32>
    %133 = tpu.concatenate %132, %115 in 1 : vector<8x128xf32>, vector<8x128xf32> -> vector<8x256xf32>
    %134 = arith.truncf %133 : vector<8x256xf32> to vector<8x256xbf16>
    %cst_53 = arith.constant dense<0.000000e+00> : vector<8x128xf32>
    %135 = tpu.matmul %134, %4, %cst_53 {dimension_numbers = #tpu.dot_dimension_numbers<[1], [0], [0], [1], [0, 0, 1, 1], [], []>} : vector<8x256xbf16>, vector<256x128xbf16>, vector<8x128xf32> -> vector<8x128xf32>
    %136 = vector.broadcast %6 : vector<1x128xf32> to vector<8x128xf32>
    %137 = arith.addf %135, %136 : vector<8x128xf32>
    %138 = math.tanh %137 : vector<8x128xf32>
    %139 = tpu.concatenate %138, %121 in 1 : vector<8x128xf32>, vector<8x128xf32> -> vector<8x256xf32>
    %140 = arith.truncf %139 : vector<8x256xf32> to vector<8x256xbf16>
    %cst_54 = arith.constant dense<0.000000e+00> : vector<8x128xf32>
    %141 = tpu.matmul %140, %5, %cst_54 {dimension_numbers = #tpu.dot_dimension_numbers<[1], [0], [0], [1], [0, 0, 1, 1], [], []>} : vector<8x256xbf16>, vector<256x128xbf16>, vector<8x128xf32> -> vector<8x128xf32>
    %142 = vector.broadcast %7 : vector<1x128xf32> to vector<8x128xf32>
    %143 = arith.addf %141, %142 : vector<8x128xf32>
    %144 = math.tanh %143 : vector<8x128xf32>
    %145 = arith.index_cast %c5_i32 : i32 to index
    %c0_55 = arith.constant 0 : index
    %c0_56 = arith.constant 0 : index
    %146 = vector.load %arg7[%145, %c0_55, %c0_56] : memref<16x8x128xf32, #tpu.memory_space<vmem>>, vector<1x8x128xf32>
    %147 = vector.shape_cast %146 : vector<1x8x128xf32> to vector<8x128xf32>
    %148 = vector.shape_cast %144 : vector<8x128xf32> to vector<1x8x128xf32>
    tpu.vector_store %arg7[%145, %c0_55, %c0_56], %148 {strides = array<i32>} : memref<16x8x128xf32, #tpu.memory_space<vmem>>, vector<1x8x128xf32>,
    %c6_i32 = arith.constant 6 : i32
    %149 = arith.index_cast %c6_i32 : i32 to index
    %c0_57 = arith.constant 0 : index
    %c0_58 = arith.constant 0 : index
    %150 = vector.load %arg2[%149, %c0_57, %c0_58] : memref<16x8x128xf32, #tpu.memory_space<vmem>>, vector<1x8x128xf32>
    %151 = vector.shape_cast %150 : vector<1x8x128xf32> to vector<8x128xf32>
    %152 = arith.truncf %132 : vector<8x128xf32> to vector<8x128xbf16>
    %cst_59 = arith.constant dense<0.000000e+00> : vector<8x128xf32>
    %153 = tpu.matmul %152, %3, %cst_59 {dimension_numbers = #tpu.dot_dimension_numbers<[1], [0], [0], [1], [0, 0, 1, 1], [], []>} : vector<8x128xbf16>, vector<128x128xbf16>, vector<8x128xf32> -> vector<8x128xf32>
    %154 = arith.addf %151, %153 : vector<8x128xf32>
    %155 = math.tanh %154 : vector<8x128xf32>
    %156 = tpu.concatenate %155, %138 in 1 : vector<8x128xf32>, vector<8x128xf32> -> vector<8x256xf32>
    %157 = arith.truncf %156 : vector<8x256xf32> to vector<8x256xbf16>
    %cst_60 = arith.constant dense<0.000000e+00> : vector<8x128xf32>
    %158 = tpu.matmul %157, %4, %cst_60 {dimension_numbers = #tpu.dot_dimension_numbers<[1], [0], [0], [1], [0, 0, 1, 1], [], []>} : vector<8x256xbf16>, vector<256x128xbf16>, vector<8x128xf32> -> vector<8x128xf32>
    %159 = vector.broadcast %6 : vector<1x128xf32> to vector<8x128xf32>
    %160 = arith.addf %158, %159 : vector<8x128xf32>
    %161 = math.tanh %160 : vector<8x128xf32>
    %162 = tpu.concatenate %161, %144 in 1 : vector<8x128xf32>, vector<8x128xf32> -> vector<8x256xf32>
    %163 = arith.truncf %162 : vector<8x256xf32> to vector<8x256xbf16>
    %cst_61 = arith.constant dense<0.000000e+00> : vector<8x128xf32>
    %164 = tpu.matmul %163, %5, %cst_61 {dimension_numbers = #tpu.dot_dimension_numbers<[1], [0], [0], [1], [0, 0, 1, 1], [], []>} : vector<8x256xbf16>, vector<256x128xbf16>, vector<8x128xf32> -> vector<8x128xf32>
    %165 = vector.broadcast %7 : vector<1x128xf32> to vector<8x128xf32>
    %166 = arith.addf %164, %165 : vector<8x128xf32>
    %167 = math.tanh %166 : vector<8x128xf32>
    %168 = arith.index_cast %c6_i32 : i32 to index
    %c0_62 = arith.constant 0 : index
    %c0_63 = arith.constant 0 : index
    %169 = vector.load %arg7[%168, %c0_62, %c0_63] : memref<16x8x128xf32, #tpu.memory_space<vmem>>, vector<1x8x128xf32>
    %170 = vector.shape_cast %169 : vector<1x8x128xf32> to vector<8x128xf32>
    %171 = vector.shape_cast %167 : vector<8x128xf32> to vector<1x8x128xf32>
    tpu.vector_store %arg7[%168, %c0_62, %c0_63], %171 {strides = array<i32>} : memref<16x8x128xf32, #tpu.memory_space<vmem>>, vector<1x8x128xf32>,
    %c7_i32 = arith.constant 7 : i32
    %172 = arith.index_cast %c7_i32 : i32 to index
    %c0_64 = arith.constant 0 : index
    %c0_65 = arith.constant 0 : index
    %173 = vector.load %arg2[%172, %c0_64, %c0_65] : memref<16x8x128xf32, #tpu.memory_space<vmem>>, vector<1x8x128xf32>
    %174 = vector.shape_cast %173 : vector<1x8x128xf32> to vector<8x128xf32>
    %175 = arith.truncf %155 : vector<8x128xf32> to vector<8x128xbf16>
    %cst_66 = arith.constant dense<0.000000e+00> : vector<8x128xf32>
    %176 = tpu.matmul %175, %3, %cst_66 {dimension_numbers = #tpu.dot_dimension_numbers<[1], [0], [0], [1], [0, 0, 1, 1], [], []>} : vector<8x128xbf16>, vector<128x128xbf16>, vector<8x128xf32> -> vector<8x128xf32>
    %177 = arith.addf %174, %176 : vector<8x128xf32>
    %178 = math.tanh %177 : vector<8x128xf32>
    %179 = tpu.concatenate %178, %161 in 1 : vector<8x128xf32>, vector<8x128xf32> -> vector<8x256xf32>
    %180 = arith.truncf %179 : vector<8x256xf32> to vector<8x256xbf16>
    %cst_67 = arith.constant dense<0.000000e+00> : vector<8x128xf32>
    %181 = tpu.matmul %180, %4, %cst_67 {dimension_numbers = #tpu.dot_dimension_numbers<[1], [0], [0], [1], [0, 0, 1, 1], [], []>} : vector<8x256xbf16>, vector<256x128xbf16>, vector<8x128xf32> -> vector<8x128xf32>
    %182 = vector.broadcast %6 : vector<1x128xf32> to vector<8x128xf32>
    %183 = arith.addf %181, %182 : vector<8x128xf32>
    %184 = math.tanh %183 : vector<8x128xf32>
    %185 = tpu.concatenate %184, %167 in 1 : vector<8x128xf32>, vector<8x128xf32> -> vector<8x256xf32>
    %186 = arith.truncf %185 : vector<8x256xf32> to vector<8x256xbf16>
    %cst_68 = arith.constant dense<0.000000e+00> : vector<8x128xf32>
    %187 = tpu.matmul %186, %5, %cst_68 {dimension_numbers = #tpu.dot_dimension_numbers<[1], [0], [0], [1], [0, 0, 1, 1], [], []>} : vector<8x256xbf16>, vector<256x128xbf16>, vector<8x128xf32> -> vector<8x128xf32>
    %188 = vector.broadcast %7 : vector<1x128xf32> to vector<8x128xf32>
    %189 = arith.addf %187, %188 : vector<8x128xf32>
    %190 = math.tanh %189 : vector<8x128xf32>
    %191 = arith.index_cast %c7_i32 : i32 to index
    %c0_69 = arith.constant 0 : index
    %c0_70 = arith.constant 0 : index
    %192 = vector.load %arg7[%191, %c0_69, %c0_70] : memref<16x8x128xf32, #tpu.memory_space<vmem>>, vector<1x8x128xf32>
    %193 = vector.shape_cast %192 : vector<1x8x128xf32> to vector<8x128xf32>
    %194 = vector.shape_cast %190 : vector<8x128xf32> to vector<1x8x128xf32>
    tpu.vector_store %arg7[%191, %c0_69, %c0_70], %194 {strides = array<i32>} : memref<16x8x128xf32, #tpu.memory_space<vmem>>, vector<1x8x128xf32>,
    %c8_i32 = arith.constant 8 : i32
    %195 = arith.index_cast %c8_i32 : i32 to index
    %c0_71 = arith.constant 0 : index
    %c0_72 = arith.constant 0 : index
    %196 = vector.load %arg2[%195, %c0_71, %c0_72] : memref<16x8x128xf32, #tpu.memory_space<vmem>>, vector<1x8x128xf32>
    %197 = vector.shape_cast %196 : vector<1x8x128xf32> to vector<8x128xf32>
    %198 = arith.truncf %178 : vector<8x128xf32> to vector<8x128xbf16>
    %cst_73 = arith.constant dense<0.000000e+00> : vector<8x128xf32>
    %199 = tpu.matmul %198, %3, %cst_73 {dimension_numbers = #tpu.dot_dimension_numbers<[1], [0], [0], [1], [0, 0, 1, 1], [], []>} : vector<8x128xbf16>, vector<128x128xbf16>, vector<8x128xf32> -> vector<8x128xf32>
    %200 = arith.addf %197, %199 : vector<8x128xf32>
    %201 = math.tanh %200 : vector<8x128xf32>
    %202 = tpu.concatenate %201, %184 in 1 : vector<8x128xf32>, vector<8x128xf32> -> vector<8x256xf32>
    %203 = arith.truncf %202 : vector<8x256xf32> to vector<8x256xbf16>
    %cst_74 = arith.constant dense<0.000000e+00> : vector<8x128xf32>
    %204 = tpu.matmul %203, %4, %cst_74 {dimension_numbers = #tpu.dot_dimension_numbers<[1], [0], [0], [1], [0, 0, 1, 1], [], []>} : vector<8x256xbf16>, vector<256x128xbf16>, vector<8x128xf32> -> vector<8x128xf32>
    %205 = vector.broadcast %6 : vector<1x128xf32> to vector<8x128xf32>
    %206 = arith.addf %204, %205 : vector<8x128xf32>
    %207 = math.tanh %206 : vector<8x128xf32>
    %208 = tpu.concatenate %207, %190 in 1 : vector<8x128xf32>, vector<8x128xf32> -> vector<8x256xf32>
    %209 = arith.truncf %208 : vector<8x256xf32> to vector<8x256xbf16>
    %cst_75 = arith.constant dense<0.000000e+00> : vector<8x128xf32>
    %210 = tpu.matmul %209, %5, %cst_75 {dimension_numbers = #tpu.dot_dimension_numbers<[1], [0], [0], [1], [0, 0, 1, 1], [], []>} : vector<8x256xbf16>, vector<256x128xbf16>, vector<8x128xf32> -> vector<8x128xf32>
    %211 = vector.broadcast %7 : vector<1x128xf32> to vector<8x128xf32>
    %212 = arith.addf %210, %211 : vector<8x128xf32>
    %213 = math.tanh %212 : vector<8x128xf32>
    %214 = arith.index_cast %c8_i32 : i32 to index
    %c0_76 = arith.constant 0 : index
    %c0_77 = arith.constant 0 : index
    %215 = vector.load %arg7[%214, %c0_76, %c0_77] : memref<16x8x128xf32, #tpu.memory_space<vmem>>, vector<1x8x128xf32>
    %216 = vector.shape_cast %215 : vector<1x8x128xf32> to vector<8x128xf32>
    %217 = vector.shape_cast %213 : vector<8x128xf32> to vector<1x8x128xf32>
    tpu.vector_store %arg7[%214, %c0_76, %c0_77], %217 {strides = array<i32>} : memref<16x8x128xf32, #tpu.memory_space<vmem>>, vector<1x8x128xf32>,
    %c9_i32 = arith.constant 9 : i32
    %218 = arith.index_cast %c9_i32 : i32 to index
    %c0_78 = arith.constant 0 : index
    %c0_79 = arith.constant 0 : index
    %219 = vector.load %arg2[%218, %c0_78, %c0_79] : memref<16x8x128xf32, #tpu.memory_space<vmem>>, vector<1x8x128xf32>
    %220 = vector.shape_cast %219 : vector<1x8x128xf32> to vector<8x128xf32>
    %221 = arith.truncf %201 : vector<8x128xf32> to vector<8x128xbf16>
    %cst_80 = arith.constant dense<0.000000e+00> : vector<8x128xf32>
    %222 = tpu.matmul %221, %3, %cst_80 {dimension_numbers = #tpu.dot_dimension_numbers<[1], [0], [0], [1], [0, 0, 1, 1], [], []>} : vector<8x128xbf16>, vector<128x128xbf16>, vector<8x128xf32> -> vector<8x128xf32>
    %223 = arith.addf %220, %222 : vector<8x128xf32>
    %224 = math.tanh %223 : vector<8x128xf32>
    %225 = tpu.concatenate %224, %207 in 1 : vector<8x128xf32>, vector<8x128xf32> -> vector<8x256xf32>
    %226 = arith.truncf %225 : vector<8x256xf32> to vector<8x256xbf16>
    %cst_81 = arith.constant dense<0.000000e+00> : vector<8x128xf32>
    %227 = tpu.matmul %226, %4, %cst_81 {dimension_numbers = #tpu.dot_dimension_numbers<[1], [0], [0], [1], [0, 0, 1, 1], [], []>} : vector<8x256xbf16>, vector<256x128xbf16>, vector<8x128xf32> -> vector<8x128xf32>
    %228 = vector.broadcast %6 : vector<1x128xf32> to vector<8x128xf32>
    %229 = arith.addf %227, %228 : vector<8x128xf32>
    %230 = math.tanh %229 : vector<8x128xf32>
    %231 = tpu.concatenate %230, %213 in 1 : vector<8x128xf32>, vector<8x128xf32> -> vector<8x256xf32>
    %232 = arith.truncf %231 : vector<8x256xf32> to vector<8x256xbf16>
    %cst_82 = arith.constant dense<0.000000e+00> : vector<8x128xf32>
    %233 = tpu.matmul %232, %5, %cst_82 {dimension_numbers = #tpu.dot_dimension_numbers<[1], [0], [0], [1], [0, 0, 1, 1], [], []>} : vector<8x256xbf16>, vector<256x128xbf16>, vector<8x128xf32> -> vector<8x128xf32>
    %234 = vector.broadcast %7 : vector<1x128xf32> to vector<8x128xf32>
    %235 = arith.addf %233, %234 : vector<8x128xf32>
    %236 = math.tanh %235 : vector<8x128xf32>
    %237 = arith.index_cast %c9_i32 : i32 to index
    %c0_83 = arith.constant 0 : index
    %c0_84 = arith.constant 0 : index
    %238 = vector.load %arg7[%237, %c0_83, %c0_84] : memref<16x8x128xf32, #tpu.memory_space<vmem>>, vector<1x8x128xf32>
    %239 = vector.shape_cast %238 : vector<1x8x128xf32> to vector<8x128xf32>
    %240 = vector.shape_cast %236 : vector<8x128xf32> to vector<1x8x128xf32>
    tpu.vector_store %arg7[%237, %c0_83, %c0_84], %240 {strides = array<i32>} : memref<16x8x128xf32, #tpu.memory_space<vmem>>, vector<1x8x128xf32>,
    %c10_i32 = arith.constant 10 : i32
    %241 = arith.index_cast %c10_i32 : i32 to index
    %c0_85 = arith.constant 0 : index
    %c0_86 = arith.constant 0 : index
    %242 = vector.load %arg2[%241, %c0_85, %c0_86] : memref<16x8x128xf32, #tpu.memory_space<vmem>>, vector<1x8x128xf32>
    %243 = vector.shape_cast %242 : vector<1x8x128xf32> to vector<8x128xf32>
    %244 = arith.truncf %224 : vector<8x128xf32> to vector<8x128xbf16>
    %cst_87 = arith.constant dense<0.000000e+00> : vector<8x128xf32>
    %245 = tpu.matmul %244, %3, %cst_87 {dimension_numbers = #tpu.dot_dimension_numbers<[1], [0], [0], [1], [0, 0, 1, 1], [], []>} : vector<8x128xbf16>, vector<128x128xbf16>, vector<8x128xf32> -> vector<8x128xf32>
    %246 = arith.addf %243, %245 : vector<8x128xf32>
    %247 = math.tanh %246 : vector<8x128xf32>
    %248 = tpu.concatenate %247, %230 in 1 : vector<8x128xf32>, vector<8x128xf32> -> vector<8x256xf32>
    %249 = arith.truncf %248 : vector<8x256xf32> to vector<8x256xbf16>
    %cst_88 = arith.constant dense<0.000000e+00> : vector<8x128xf32>
    %250 = tpu.matmul %249, %4, %cst_88 {dimension_numbers = #tpu.dot_dimension_numbers<[1], [0], [0], [1], [0, 0, 1, 1], [], []>} : vector<8x256xbf16>, vector<256x128xbf16>, vector<8x128xf32> -> vector<8x128xf32>
    %251 = vector.broadcast %6 : vector<1x128xf32> to vector<8x128xf32>
    %252 = arith.addf %250, %251 : vector<8x128xf32>
    %253 = math.tanh %252 : vector<8x128xf32>
    %254 = tpu.concatenate %253, %236 in 1 : vector<8x128xf32>, vector<8x128xf32> -> vector<8x256xf32>
    %255 = arith.truncf %254 : vector<8x256xf32> to vector<8x256xbf16>
    %cst_89 = arith.constant dense<0.000000e+00> : vector<8x128xf32>
    %256 = tpu.matmul %255, %5, %cst_89 {dimension_numbers = #tpu.dot_dimension_numbers<[1], [0], [0], [1], [0, 0, 1, 1], [], []>} : vector<8x256xbf16>, vector<256x128xbf16>, vector<8x128xf32> -> vector<8x128xf32>
    %257 = vector.broadcast %7 : vector<1x128xf32> to vector<8x128xf32>
    %258 = arith.addf %256, %257 : vector<8x128xf32>
    %259 = math.tanh %258 : vector<8x128xf32>
    %260 = arith.index_cast %c10_i32 : i32 to index
    %c0_90 = arith.constant 0 : index
    %c0_91 = arith.constant 0 : index
    %261 = vector.load %arg7[%260, %c0_90, %c0_91] : memref<16x8x128xf32, #tpu.memory_space<vmem>>, vector<1x8x128xf32>
    %262 = vector.shape_cast %261 : vector<1x8x128xf32> to vector<8x128xf32>
    %263 = vector.shape_cast %259 : vector<8x128xf32> to vector<1x8x128xf32>
    tpu.vector_store %arg7[%260, %c0_90, %c0_91], %263 {strides = array<i32>} : memref<16x8x128xf32, #tpu.memory_space<vmem>>, vector<1x8x128xf32>,
    %c11_i32 = arith.constant 11 : i32
    %264 = arith.index_cast %c11_i32 : i32 to index
    %c0_92 = arith.constant 0 : index
    %c0_93 = arith.constant 0 : index
    %265 = vector.load %arg2[%264, %c0_92, %c0_93] : memref<16x8x128xf32, #tpu.memory_space<vmem>>, vector<1x8x128xf32>
    %266 = vector.shape_cast %265 : vector<1x8x128xf32> to vector<8x128xf32>
    %267 = arith.truncf %247 : vector<8x128xf32> to vector<8x128xbf16>
    %cst_94 = arith.constant dense<0.000000e+00> : vector<8x128xf32>
    %268 = tpu.matmul %267, %3, %cst_94 {dimension_numbers = #tpu.dot_dimension_numbers<[1], [0], [0], [1], [0, 0, 1, 1], [], []>} : vector<8x128xbf16>, vector<128x128xbf16>, vector<8x128xf32> -> vector<8x128xf32>
    %269 = arith.addf %266, %268 : vector<8x128xf32>
    %270 = math.tanh %269 : vector<8x128xf32>
    %271 = tpu.concatenate %270, %253 in 1 : vector<8x128xf32>, vector<8x128xf32> -> vector<8x256xf32>
    %272 = arith.truncf %271 : vector<8x256xf32> to vector<8x256xbf16>
    %cst_95 = arith.constant dense<0.000000e+00> : vector<8x128xf32>
    %273 = tpu.matmul %272, %4, %cst_95 {dimension_numbers = #tpu.dot_dimension_numbers<[1], [0], [0], [1], [0, 0, 1, 1], [], []>} : vector<8x256xbf16>, vector<256x128xbf16>, vector<8x128xf32> -> vector<8x128xf32>
    %274 = vector.broadcast %6 : vector<1x128xf32> to vector<8x128xf32>
    %275 = arith.addf %273, %274 : vector<8x128xf32>
    %276 = math.tanh %275 : vector<8x128xf32>
    %277 = tpu.concatenate %276, %259 in 1 : vector<8x128xf32>, vector<8x128xf32> -> vector<8x256xf32>
    %278 = arith.truncf %277 : vector<8x256xf32> to vector<8x256xbf16>
    %cst_96 = arith.constant dense<0.000000e+00> : vector<8x128xf32>
    %279 = tpu.matmul %278, %5, %cst_96 {dimension_numbers = #tpu.dot_dimension_numbers<[1], [0], [0], [1], [0, 0, 1, 1], [], []>} : vector<8x256xbf16>, vector<256x128xbf16>, vector<8x128xf32> -> vector<8x128xf32>
    %280 = vector.broadcast %7 : vector<1x128xf32> to vector<8x128xf32>
    %281 = arith.addf %279, %280 : vector<8x128xf32>
    %282 = math.tanh %281 : vector<8x128xf32>
    %283 = arith.index_cast %c11_i32 : i32 to index
    %c0_97 = arith.constant 0 : index
    %c0_98 = arith.constant 0 : index
    %284 = vector.load %arg7[%283, %c0_97, %c0_98] : memref<16x8x128xf32, #tpu.memory_space<vmem>>, vector<1x8x128xf32>
    %285 = vector.shape_cast %284 : vector<1x8x128xf32> to vector<8x128xf32>
    %286 = vector.shape_cast %282 : vector<8x128xf32> to vector<1x8x128xf32>
    tpu.vector_store %arg7[%283, %c0_97, %c0_98], %286 {strides = array<i32>} : memref<16x8x128xf32, #tpu.memory_space<vmem>>, vector<1x8x128xf32>,
    %c12_i32 = arith.constant 12 : i32
    %287 = arith.index_cast %c12_i32 : i32 to index
    %c0_99 = arith.constant 0 : index
    %c0_100 = arith.constant 0 : index
    %288 = vector.load %arg2[%287, %c0_99, %c0_100] : memref<16x8x128xf32, #tpu.memory_space<vmem>>, vector<1x8x128xf32>
    %289 = vector.shape_cast %288 : vector<1x8x128xf32> to vector<8x128xf32>
    %290 = arith.truncf %270 : vector<8x128xf32> to vector<8x128xbf16>
    %cst_101 = arith.constant dense<0.000000e+00> : vector<8x128xf32>
    %291 = tpu.matmul %290, %3, %cst_101 {dimension_numbers = #tpu.dot_dimension_numbers<[1], [0], [0], [1], [0, 0, 1, 1], [], []>} : vector<8x128xbf16>, vector<128x128xbf16>, vector<8x128xf32> -> vector<8x128xf32>
    %292 = arith.addf %289, %291 : vector<8x128xf32>
    %293 = math.tanh %292 : vector<8x128xf32>
    %294 = tpu.concatenate %293, %276 in 1 : vector<8x128xf32>, vector<8x128xf32> -> vector<8x256xf32>
    %295 = arith.truncf %294 : vector<8x256xf32> to vector<8x256xbf16>
    %cst_102 = arith.constant dense<0.000000e+00> : vector<8x128xf32>
    %296 = tpu.matmul %295, %4, %cst_102 {dimension_numbers = #tpu.dot_dimension_numbers<[1], [0], [0], [1], [0, 0, 1, 1], [], []>} : vector<8x256xbf16>, vector<256x128xbf16>, vector<8x128xf32> -> vector<8x128xf32>
    %297 = vector.broadcast %6 : vector<1x128xf32> to vector<8x128xf32>
    %298 = arith.addf %296, %297 : vector<8x128xf32>
    %299 = math.tanh %298 : vector<8x128xf32>
    %300 = tpu.concatenate %299, %282 in 1 : vector<8x128xf32>, vector<8x128xf32> -> vector<8x256xf32>
    %301 = arith.truncf %300 : vector<8x256xf32> to vector<8x256xbf16>
    %cst_103 = arith.constant dense<0.000000e+00> : vector<8x128xf32>
    %302 = tpu.matmul %301, %5, %cst_103 {dimension_numbers = #tpu.dot_dimension_numbers<[1], [0], [0], [1], [0, 0, 1, 1], [], []>} : vector<8x256xbf16>, vector<256x128xbf16>, vector<8x128xf32> -> vector<8x128xf32>
    %303 = vector.broadcast %7 : vector<1x128xf32> to vector<8x128xf32>
    %304 = arith.addf %302, %303 : vector<8x128xf32>
    %305 = math.tanh %304 : vector<8x128xf32>
    %306 = arith.index_cast %c12_i32 : i32 to index
    %c0_104 = arith.constant 0 : index
    %c0_105 = arith.constant 0 : index
    %307 = vector.load %arg7[%306, %c0_104, %c0_105] : memref<16x8x128xf32, #tpu.memory_space<vmem>>, vector<1x8x128xf32>
    %308 = vector.shape_cast %307 : vector<1x8x128xf32> to vector<8x128xf32>
    %309 = vector.shape_cast %305 : vector<8x128xf32> to vector<1x8x128xf32>
    tpu.vector_store %arg7[%306, %c0_104, %c0_105], %309 {strides = array<i32>} : memref<16x8x128xf32, #tpu.memory_space<vmem>>, vector<1x8x128xf32>,
    %c13_i32 = arith.constant 13 : i32
    %310 = arith.index_cast %c13_i32 : i32 to index
    %c0_106 = arith.constant 0 : index
    %c0_107 = arith.constant 0 : index
    %311 = vector.load %arg2[%310, %c0_106, %c0_107] : memref<16x8x128xf32, #tpu.memory_space<vmem>>, vector<1x8x128xf32>
    %312 = vector.shape_cast %311 : vector<1x8x128xf32> to vector<8x128xf32>
    %313 = arith.truncf %293 : vector<8x128xf32> to vector<8x128xbf16>
    %cst_108 = arith.constant dense<0.000000e+00> : vector<8x128xf32>
    %314 = tpu.matmul %313, %3, %cst_108 {dimension_numbers = #tpu.dot_dimension_numbers<[1], [0], [0], [1], [0, 0, 1, 1], [], []>} : vector<8x128xbf16>, vector<128x128xbf16>, vector<8x128xf32> -> vector<8x128xf32>
    %315 = arith.addf %312, %314 : vector<8x128xf32>
    %316 = math.tanh %315 : vector<8x128xf32>
    %317 = tpu.concatenate %316, %299 in 1 : vector<8x128xf32>, vector<8x128xf32> -> vector<8x256xf32>
    %318 = arith.truncf %317 : vector<8x256xf32> to vector<8x256xbf16>
    %cst_109 = arith.constant dense<0.000000e+00> : vector<8x128xf32>
    %319 = tpu.matmul %318, %4, %cst_109 {dimension_numbers = #tpu.dot_dimension_numbers<[1], [0], [0], [1], [0, 0, 1, 1], [], []>} : vector<8x256xbf16>, vector<256x128xbf16>, vector<8x128xf32> -> vector<8x128xf32>
    %320 = vector.broadcast %6 : vector<1x128xf32> to vector<8x128xf32>
    %321 = arith.addf %319, %320 : vector<8x128xf32>
    %322 = math.tanh %321 : vector<8x128xf32>
    %323 = tpu.concatenate %322, %305 in 1 : vector<8x128xf32>, vector<8x128xf32> -> vector<8x256xf32>
    %324 = arith.truncf %323 : vector<8x256xf32> to vector<8x256xbf16>
    %cst_110 = arith.constant dense<0.000000e+00> : vector<8x128xf32>
    %325 = tpu.matmul %324, %5, %cst_110 {dimension_numbers = #tpu.dot_dimension_numbers<[1], [0], [0], [1], [0, 0, 1, 1], [], []>} : vector<8x256xbf16>, vector<256x128xbf16>, vector<8x128xf32> -> vector<8x128xf32>
    %326 = vector.broadcast %7 : vector<1x128xf32> to vector<8x128xf32>
    %327 = arith.addf %325, %326 : vector<8x128xf32>
    %328 = math.tanh %327 : vector<8x128xf32>
    %329 = arith.index_cast %c13_i32 : i32 to index
    %c0_111 = arith.constant 0 : index
    %c0_112 = arith.constant 0 : index
    %330 = vector.load %arg7[%329, %c0_111, %c0_112] : memref<16x8x128xf32, #tpu.memory_space<vmem>>, vector<1x8x128xf32>
    %331 = vector.shape_cast %330 : vector<1x8x128xf32> to vector<8x128xf32>
    %332 = vector.shape_cast %328 : vector<8x128xf32> to vector<1x8x128xf32>
    tpu.vector_store %arg7[%329, %c0_111, %c0_112], %332 {strides = array<i32>} : memref<16x8x128xf32, #tpu.memory_space<vmem>>, vector<1x8x128xf32>,
    %c14_i32 = arith.constant 14 : i32
    %333 = arith.index_cast %c14_i32 : i32 to index
    %c0_113 = arith.constant 0 : index
    %c0_114 = arith.constant 0 : index
    %334 = vector.load %arg2[%333, %c0_113, %c0_114] : memref<16x8x128xf32, #tpu.memory_space<vmem>>, vector<1x8x128xf32>
    %335 = vector.shape_cast %334 : vector<1x8x128xf32> to vector<8x128xf32>
    %336 = arith.truncf %316 : vector<8x128xf32> to vector<8x128xbf16>
    %cst_115 = arith.constant dense<0.000000e+00> : vector<8x128xf32>
    %337 = tpu.matmul %336, %3, %cst_115 {dimension_numbers = #tpu.dot_dimension_numbers<[1], [0], [0], [1], [0, 0, 1, 1], [], []>} : vector<8x128xbf16>, vector<128x128xbf16>, vector<8x128xf32> -> vector<8x128xf32>
    %338 = arith.addf %335, %337 : vector<8x128xf32>
    %339 = math.tanh %338 : vector<8x128xf32>
    %340 = tpu.concatenate %339, %322 in 1 : vector<8x128xf32>, vector<8x128xf32> -> vector<8x256xf32>
    %341 = arith.truncf %340 : vector<8x256xf32> to vector<8x256xbf16>
    %cst_116 = arith.constant dense<0.000000e+00> : vector<8x128xf32>
    %342 = tpu.matmul %341, %4, %cst_116 {dimension_numbers = #tpu.dot_dimension_numbers<[1], [0], [0], [1], [0, 0, 1, 1], [], []>} : vector<8x256xbf16>, vector<256x128xbf16>, vector<8x128xf32> -> vector<8x128xf32>
    %343 = vector.broadcast %6 : vector<1x128xf32> to vector<8x128xf32>
    %344 = arith.addf %342, %343 : vector<8x128xf32>
    %345 = math.tanh %344 : vector<8x128xf32>
    %346 = tpu.concatenate %345, %328 in 1 : vector<8x128xf32>, vector<8x128xf32> -> vector<8x256xf32>
    %347 = arith.truncf %346 : vector<8x256xf32> to vector<8x256xbf16>
    %cst_117 = arith.constant dense<0.000000e+00> : vector<8x128xf32>
    %348 = tpu.matmul %347, %5, %cst_117 {dimension_numbers = #tpu.dot_dimension_numbers<[1], [0], [0], [1], [0, 0, 1, 1], [], []>} : vector<8x256xbf16>, vector<256x128xbf16>, vector<8x128xf32> -> vector<8x128xf32>
    %349 = vector.broadcast %7 : vector<1x128xf32> to vector<8x128xf32>
    %350 = arith.addf %348, %349 : vector<8x128xf32>
    %351 = math.tanh %350 : vector<8x128xf32>
    %352 = arith.index_cast %c14_i32 : i32 to index
    %c0_118 = arith.constant 0 : index
    %c0_119 = arith.constant 0 : index
    %353 = vector.load %arg7[%352, %c0_118, %c0_119] : memref<16x8x128xf32, #tpu.memory_space<vmem>>, vector<1x8x128xf32>
    %354 = vector.shape_cast %353 : vector<1x8x128xf32> to vector<8x128xf32>
    %355 = vector.shape_cast %351 : vector<8x128xf32> to vector<1x8x128xf32>
    tpu.vector_store %arg7[%352, %c0_118, %c0_119], %355 {strides = array<i32>} : memref<16x8x128xf32, #tpu.memory_space<vmem>>, vector<1x8x128xf32>,
    %c15_i32 = arith.constant 15 : i32
    %356 = arith.index_cast %c15_i32 : i32 to index
    %c0_120 = arith.constant 0 : index
    %c0_121 = arith.constant 0 : index
    %357 = vector.load %arg2[%356, %c0_120, %c0_121] : memref<16x8x128xf32, #tpu.memory_space<vmem>>, vector<1x8x128xf32>
    %358 = vector.shape_cast %357 : vector<1x8x128xf32> to vector<8x128xf32>
    %359 = arith.truncf %339 : vector<8x128xf32> to vector<8x128xbf16>
    %cst_122 = arith.constant dense<0.000000e+00> : vector<8x128xf32>
    %360 = tpu.matmul %359, %3, %cst_122 {dimension_numbers = #tpu.dot_dimension_numbers<[1], [0], [0], [1], [0, 0, 1, 1], [], []>} : vector<8x128xbf16>, vector<128x128xbf16>, vector<8x128xf32> -> vector<8x128xf32>
    %361 = arith.addf %358, %360 : vector<8x128xf32>
    %362 = math.tanh %361 : vector<8x128xf32>
    %363 = tpu.concatenate %362, %345 in 1 : vector<8x128xf32>, vector<8x128xf32> -> vector<8x256xf32>
    %364 = arith.truncf %363 : vector<8x256xf32> to vector<8x256xbf16>
    %cst_123 = arith.constant dense<0.000000e+00> : vector<8x128xf32>
    %365 = tpu.matmul %364, %4, %cst_123 {dimension_numbers = #tpu.dot_dimension_numbers<[1], [0], [0], [1], [0, 0, 1, 1], [], []>} : vector<8x256xbf16>, vector<256x128xbf16>, vector<8x128xf32> -> vector<8x128xf32>
    %366 = vector.broadcast %6 : vector<1x128xf32> to vector<8x128xf32>
    %367 = arith.addf %365, %366 : vector<8x128xf32>
    %368 = math.tanh %367 : vector<8x128xf32>
    %369 = tpu.concatenate %368, %351 in 1 : vector<8x128xf32>, vector<8x128xf32> -> vector<8x256xf32>
    %370 = arith.truncf %369 : vector<8x256xf32> to vector<8x256xbf16>
    %cst_124 = arith.constant dense<0.000000e+00> : vector<8x128xf32>
    %371 = tpu.matmul %370, %5, %cst_124 {dimension_numbers = #tpu.dot_dimension_numbers<[1], [0], [0], [1], [0, 0, 1, 1], [], []>} : vector<8x256xbf16>, vector<256x128xbf16>, vector<8x128xf32> -> vector<8x128xf32>
    %372 = vector.broadcast %7 : vector<1x128xf32> to vector<8x128xf32>
    %373 = arith.addf %371, %372 : vector<8x128xf32>
    %374 = math.tanh %373 : vector<8x128xf32>
    %375 = arith.index_cast %c15_i32 : i32 to index
    %c0_125 = arith.constant 0 : index
    %c0_126 = arith.constant 0 : index
    %376 = vector.load %arg7[%375, %c0_125, %c0_126] : memref<16x8x128xf32, #tpu.memory_space<vmem>>, vector<1x8x128xf32>
    %377 = vector.shape_cast %376 : vector<1x8x128xf32> to vector<8x128xf32>
    %378 = vector.shape_cast %374 : vector<8x128xf32> to vector<1x8x128xf32>
    tpu.vector_store %arg7[%375, %c0_125, %c0_126], %378 {strides = array<i32>} : memref<16x8x128xf32, #tpu.memory_space<vmem>>, vector<1x8x128xf32>,
    %c16_i32 = arith.constant 16 : i32
    %c0_127 = arith.constant 0 : index
    %c0_128 = arith.constant 0 : index
    %379 = vector.load %arg8[%c0_127, %c0_128] : memref<8x128xf32, #tpu.memory_space<vmem>>, vector<8x128xf32>
    tpu.vector_store %arg8[%c0_127, %c0_128], %362 {strides = array<i32>} : memref<8x128xf32, #tpu.memory_space<vmem>>, vector<8x128xf32>,
    %c0_129 = arith.constant 0 : index
    %c0_130 = arith.constant 0 : index
    %380 = vector.load %arg9[%c0_129, %c0_130] : memref<8x128xf32, #tpu.memory_space<vmem>>, vector<8x128xf32>
    tpu.vector_store %arg9[%c0_129, %c0_130], %368 {strides = array<i32>} : memref<8x128xf32, #tpu.memory_space<vmem>>, vector<8x128xf32>,
    %c0_131 = arith.constant 0 : index
    %c0_132 = arith.constant 0 : index
    %381 = vector.load %arg10[%c0_131, %c0_132] : memref<8x128xf32, #tpu.memory_space<vmem>>, vector<8x128xf32>
    tpu.vector_store %arg10[%c0_131, %c0_132], %374 {strides = array<i32>} : memref<8x128xf32, #tpu.memory_space<vmem>>, vector<8x128xf32>,
    return
  }
  func.func @transform_0(%arg0: i32, %arg1: i32) -> (i32, i32, i32) {
    %c0_i32 = arith.constant 0 : i32
    %c0_i32_0 = arith.constant 0 : i32
    return %arg1, %arg0, %c0_i32 : i32, i32, i32
  }
  func.func @transform_1(%arg0: i32, %arg1: i32) -> (i32, i32) {
    %c0_i32 = arith.constant 0 : i32
    %c0_i32_0 = arith.constant 0 : i32
    %c0_i32_1 = arith.constant 0 : i32
    return %c0_i32, %c0_i32_0 : i32, i32
  }
  func.func @transform_2(%arg0: i32, %arg1: i32) -> (i32, i32) {
    %c0_i32 = arith.constant 0 : i32
    %c0_i32_0 = arith.constant 0 : i32
    %c0_i32_1 = arith.constant 0 : i32
    return %c0_i32, %c0_i32_0 : i32, i32
  }
  func.func @transform_3(%arg0: i32, %arg1: i32) -> (i32, i32) {
    %c0_i32 = arith.constant 0 : i32
    %c0_i32_0 = arith.constant 0 : i32
    %c0_i32_1 = arith.constant 0 : i32
    return %c0_i32, %c0_i32_0 : i32, i32
  }
  func.func @transform_4(%arg0: i32, %arg1: i32) -> (i32, i32) {
    %c0_i32 = arith.constant 0 : i32
    %c0_i32_0 = arith.constant 0 : i32
    %c0_i32_1 = arith.constant 0 : i32
    return %c0_i32, %c0_i32_0 : i32, i32
  }
  func.func @transform_5(%arg0: i32, %arg1: i32) -> (i32, i32, i32) {
    %c0_i32 = arith.constant 0 : i32
    %c0_i32_0 = arith.constant 0 : i32
    return %arg1, %arg0, %c0_i32 : i32, i32, i32
  }
}

</mosaic_0001>

<llo_original>
// kernel: tpu_custom_call.1
$region0: #{tpu_custom_call.1}
  #allocation0 [shape = 'u32[]', space=smem, size = 0x4, offset = 0x4, fixed_abs, tag = 'smem constant byte address 0x4 - core index']
  #allocation1 [shape = 'u32[72,128]{1,0:T(1,128)}', space=vmem, size = 0x9000, scoped, tag = 'internal scratch']
  #allocation2 [shape = 'f32[8,128]{1,0:T(8,128)}', space=vmem, size = 0x1000, scoped, tag = 'scratch operand']
  #allocation3 [shape = 'f32[8,128]{1,0:T(8,128)}', space=vmem, size = 0x1000, scoped, tag = 'scratch operand']
  #allocation4 [shape = 'f32[8,128]{1,0:T(8,128)}', space=vmem, size = 0x1000, scoped, tag = 'scratch operand']
  %s0 = inlined_call_operand.hbm [shape: f32[16,8,128], index: 0, kind: input, shape index: {}]
  %s1 = inlined_call_operand.hbm [shape: bf16[128,128], index: 1, kind: input, shape index: {}]
  %s2 = inlined_call_operand.hbm [shape: bf16[256,128], index: 2, kind: input, shape index: {}]
  %s3 = inlined_call_operand.hbm [shape: bf16[256,128], index: 3, kind: input, shape index: {}]
  %s4 = inlined_call_operand.vmem [shape: f32[2,128], index: 4, kind: input, shape index: {}]
  %s5 = inlined_call_operand.hbm [shape: f32[16,8,128], index: 5, kind: output, shape index: {}]
  %s6 = sld [smem:[#allocation0]]
  $region50: #{tpu_custom_call.1} parent=0
    _
  %s8 = ssub.s32 1, %s6
  %s9 = scalar_select 0, %s8, %s6
  $region1: #{tpu_custom_call.1} parent=0
    #allocation5 [shape = 'u8[65536]{0}', space=vmem, size = 0x10000, scoped, tag = 'input window, operand 0, single buffered']
    #allocation6 [shape = 's32[1]{0}', space=sflag, size = 0x4, scoped, tag = 'scoped memory for tpu_custom_call.1']
    #allocation7 [shape = 's32[1]{0}', space=sflag, size = 0x4, scoped, tag = 'scoped memory for tpu_custom_call.1']
    #allocation8 [shape = 'u8[32768]{0}', space=vmem, size = 0x8000, scoped, tag = 'input window, operand 1, single buffered']
    #allocation9 [shape = 's32[1]{0}', space=sflag, size = 0x4, scoped, tag = 'scoped memory for tpu_custom_call.1']
    #allocation10 [shape = 'u8[65536]{0}', space=vmem, size = 0x10000, scoped, tag = 'input window, operand 2, single buffered']
    #allocation11 [shape = 'u8[65536]{0}', space=vmem, size = 0x10000, scoped, tag = 'input window, operand 3, single buffered']
    #allocation12 [shape = 's32[1]{0}', space=sflag, size = 0x4, scoped, tag = 'scoped memory for tpu_custom_call.1']
    #allocation13 [shape = 'u8[65536]{0}', space=vmem, size = 0x10000, scoped, tag = 'output window, operand 0, single buffered']
    %10 = vsyncpa [#allocation6], 0
    %11 = vsyncpa [#allocation9], 0
    %12 = vsyncpa [#allocation12], 0
    %13 = vsyncpa [#allocation7], 0
    // Predicated region
    $region2: #{tpu_custom_call.1} parent=1 // pred_check
      _
    $region3: #{tpu_custom_call.1} parent=1 // pred_check_branch
      %15 = sbr.rel (0) target = $region5
    $region4: #{tpu_custom_call.1} parent=1 // pred_region
      %17 = vsyncadd [#allocation6], 0
      %s18 = sshll.u32 %s0, 4
      %s19 = int_to_ptr.hbm [resolvable:$true] %s18
      %s20 = sshll.u32 [#allocation5], 4
      %s21 = int_to_ptr.vmem [resolvable:$true] %s20
      %26 = dma.hbm_to_vmem [thread:$0]  %s19, 2048, %s21, [#allocation6], 128, 128, 8
    $region5: #{tpu_custom_call.1} parent=1 // pred_fallthru
      _
    // Predicated region
    $region6: #{tpu_custom_call.1} parent=1 // pred_check
      _
    $region7: #{tpu_custom_call.1} parent=1 // pred_check_branch
      %28 = sbr.rel (0) target = $region9
    $region8: #{tpu_custom_call.1} parent=1 // pred_region
      %30 = vsyncadd [#allocation9], 0
      %s31 = sshll.u32 %s1, 4
      %s32 = int_to_ptr.hbm [resolvable:$true] %s31
      %s33 = sshll.u32 [#allocation8], 4
      %s34 = int_to_ptr.vmem [resolvable:$true] %s33
      %39 = dma.hbm_to_vmem [thread:$0]  %s32, 1024, %s34, [#allocation9], 64, 64, 4
    $region9: #{tpu_custom_call.1} parent=1 // pred_fallthru
      _
    // Predicated region
    $region10: #{tpu_custom_call.1} parent=1 // pred_check
      _
    $region11: #{tpu_custom_call.1} parent=1 // pred_check_branch
      %41 = sbr.rel (0) target = $region13
    $region12: #{tpu_custom_call.1} parent=1 // pred_region
      %43 = vsyncadd [#allocation9], 0
      %s44 = sshll.u32 %s2, 4
      %s45 = int_to_ptr.hbm [resolvable:$true] %s44
      %s46 = sshll.u32 [#allocation10], 4
      %s47 = int_to_ptr.vmem [resolvable:$true] %s46
      %52 = dma.hbm_to_vmem [thread:$0]  %s45, 2048, %s47, [#allocation9], 64, 64, 4
    $region13: #{tpu_custom_call.1} parent=1 // pred_fallthru
      _
    // Predicated region
    $region14: #{tpu_custom_call.1} parent=1 // pred_check
      _
    $region15: #{tpu_custom_call.1} parent=1 // pred_check_branch
      %54 = sbr.rel (0) target = $region17
    $region16: #{tpu_custom_call.1} parent=1 // pred_region
      %56 = vsyncadd [#allocation12], 0
      %s57 = sshll.u32 %s3, 4
      %s58 = int_to_ptr.hbm [resolvable:$true] %s57
      %s59 = sshll.u32 [#allocation11], 4
      %s60 = int_to_ptr.vmem [resolvable:$true] %s59
      %65 = dma.hbm_to_vmem [thread:$0]  %s58, 2048, %s60, [#allocation12], 64, 64, 4
    $region17: #{tpu_custom_call.1} parent=1 // pred_fallthru
      _
    // Predicated region
    $region18: #{tpu_custom_call.1} parent=1 // pred_check
      _
    $region19: #{tpu_custom_call.1} parent=1 // pred_check_branch
      %67 = sbr.rel (0) target = $region21
    $region20: #{tpu_custom_call.1} parent=1 // pred_region
      _
    $region21: #{tpu_custom_call.1} parent=1 // pred_fallthru
      _
    // Predicated region
    $region22: #{tpu_custom_call.1} parent=1 // pred_check
      _
    $region23: #{tpu_custom_call.1} parent=1 // pred_check_branch
      %69 = sbr.rel (0) target = $region25
    $region24: #{tpu_custom_call.1} parent=1 // pred_region
      %71 = dma.done [#allocation6], 2048
    $region25: #{tpu_custom_call.1} parent=1 // pred_fallthru
      _
    // Predicated region
    $region26: #{tpu_custom_call.1} parent=1 // pred_check
      _
    $region27: #{tpu_custom_call.1} parent=1 // pred_check_branch
      %73 = sbr.rel (0) target = $region29
    $region28: #{tpu_custom_call.1} parent=1 // pred_region
      %75 = dma.done [#allocation9], 1024
    $region29: #{tpu_custom_call.1} parent=1 // pred_fallthru
      _
    // Predicated region
    $region30: #{tpu_custom_call.1} parent=1 // pred_check
      _
    $region31: #{tpu_custom_call.1} parent=1 // pred_check_branch
      %77 = sbr.rel (0) target = $region33
    $region32: #{tpu_custom_call.1} parent=1 // pred_region
      %79 = dma.done [#allocation9], 2048
    $region33: #{tpu_custom_call.1} parent=1 // pred_fallthru
      _
    // Predicated region
    $region34: #{tpu_custom_call.1} parent=1 // pred_check
      _
    $region35: #{tpu_custom_call.1} parent=1 // pred_check_branch
      %81 = sbr.rel (0) target = $region37
    $region36: #{tpu_custom_call.1} parent=1 // pred_region
      %83 = dma.done [#allocation12], 2048
    $region37: #{tpu_custom_call.1} parent=1 // pred_fallthru
      _
    %p84 = scmp.eq.s32.totalorder 0, 0
    // Predicated region
    $region38: #{tpu_custom_call.1} parent=1 // pred_check
      %p85 = pneg %p84
    $region39: #{tpu_custom_call.1} parent=1 // pred_check_branch
      %87 = sbr.rel (%p85) target = $region41
    $region40: #{tpu_custom_call.1} parent=1 // pred_region
      %88 = vst [vmem:[#allocation2] sm:$0xff] 0.0
      %89 = vst [vmem:[#allocation3] sm:$0xff] 0.0
      %90 = vst [vmem:[#allocation4] sm:$0xff] 0.0
    $region41: #{tpu_custom_call.1} parent=1 // pred_fallthru
      _
    %v91 = vld [vmem:[#allocation8] sm:$0xf]
    %v92 = vld [vmem:[#allocation8 + $0x4] sm:$0xf]
    %v93 = vld [vmem:[#allocation8 + $0x8] sm:$0xf]
    %v94 = vld [vmem:[#allocation8 + $0xc] sm:$0xf]
    %v95 = vld [vmem:[#allocation8 + $0x10] sm:$0xf]
    %v96 = vld [vmem:[#allocation8 + $0x14] sm:$0xf]
    %v97 = vld [vmem:[#allocation8 + $0x18] sm:$0xf]
    %v98 = vld [vmem:[#allocation8 + $0x1c] sm:$0xf]
    %v99 = vld [vmem:[#allocation8 + $0x20] sm:$0xf]
    %v100 = vld [vmem:[#allocation8 + $0x24] sm:$0xf]
    %v101 = vld [vmem:[#allocation8 + $0x28] sm:$0xf]
    %v102 = vld [vmem:[#allocation8 + $0x2c] sm:$0xf]
    %v103 = vld [vmem:[#allocation8 + $0x30] sm:$0xf]
    %v104 = vld [vmem:[#allocation8 + $0x34] sm:$0xf]
    %v105 = vld [vmem:[#allocation8 + $0x38] sm:$0xf]
    %v106 = vld [vmem:[#allocation8 + $0x3c] sm:$0xf]
    %v107 = vld [vmem:[#allocation10] sm:$0xf]
    %v108 = vld [vmem:[#allocation10 + $0x4] sm:$0xf]
    %v109 = vld [vmem:[#allocation10 + $0x8] sm:$0xf]
    %v110 = vld [vmem:[#allocation10 + $0xc] sm:$0xf]
    %v111 = vld [vmem:[#allocation10 + $0x10] sm:$0xf]
    %v112 = vld [vmem:[#allocation10 + $0x14] sm:$0xf]
    %v113 = vld [vmem:[#allocation10 + $0x18] sm:$0xf]
    %v114 = vld [vmem:[#allocation10 + $0x1c] sm:$0xf]
    %v115 = vld [vmem:[#allocation10 + $0x20] sm:$0xf]
    %v116 = vld [vmem:[#allocation10 + $0x24] sm:$0xf]
    %v117 = vld [vmem:[#allocation10 + $0x28] sm:$0xf]
    %v118 = vld [vmem:[#allocation10 + $0x2c] sm:$0xf]
    %v119 = vld [vmem:[#allocation10 + $0x30] sm:$0xf]
    %v120 = vld [vmem:[#allocation10 + $0x34] sm:$0xf]
    %v121 = vld [vmem:[#allocation10 + $0x38] sm:$0xf]
    %v122 = vld [vmem:[#allocation10 + $0x3c] sm:$0xf]
    %v123 = vld [vmem:[#allocation10 + $0x40] sm:$0xf]
    %v124 = vld [vmem:[#allocation10 + $0x44] sm:$0xf]
    %v125 = vld [vmem:[#allocation10 + $0x48] sm:$0xf]
    %v126 = vld [vmem:[#allocation10 + $0x4c] sm:$0xf]
    %v127 = vld [vmem:[#allocation10 + $0x50] sm:$0xf]
    %v128 = vld [vmem:[#allocation10 + $0x54] sm:$0xf]
    %v129 = vld [vmem:[#allocation10 + $0x58] sm:$0xf]
    %v130 = vld [vmem:[#allocation10 + $0x5c] sm:$0xf]
    %v131 = vld [vmem:[#allocation10 + $0x60] sm:$0xf]
    %v132 = vld [vmem:[#allocation10 + $0x64] sm:$0xf]
    %v133 = vld [vmem:[#allocation10 + $0x68] sm:$0xf]
    %v134 = vld [vmem:[#allocation10 + $0x6c] sm:$0xf]
    %v135 = vld [vmem:[#allocation10 + $0x70] sm:$0xf]
    %v136 = vld [vmem:[#allocation10 + $0x74] sm:$0xf]
    %v137 = vld [vmem:[#allocation10 + $0x78] sm:$0xf]
    %v138 = vld [vmem:[#allocation10 + $0x7c] sm:$0xf]
    %v139 = vld [vmem:[#allocation11] sm:$0xf]
    %v140 = vld [vmem:[#allocation11 + $0x4] sm:$0xf]
    %v141 = vld [vmem:[#allocation11 + $0x8] sm:$0xf]
    %v142 = vld [vmem:[#allocation11 + $0xc] sm:$0xf]
    %v143 = vld [vmem:[#allocation11 + $0x10] sm:$0xf]
    %v144 = vld [vmem:[#allocation11 + $0x14] sm:$0xf]
    %v145 = vld [vmem:[#allocation11 + $0x18] sm:$0xf]
    %v146 = vld [vmem:[#allocation11 + $0x1c] sm:$0xf]
    %v147 = vld [vmem:[#allocation11 + $0x20] sm:$0xf]
    %v148 = vld [vmem:[#allocation11 + $0x24] sm:$0xf]
    %v149 = vld [vmem:[#allocation11 + $0x28] sm:$0xf]
    %v150 = vld [vmem:[#allocation11 + $0x2c] sm:$0xf]
    %v151 = vld [vmem:[#allocation11 + $0x30] sm:$0xf]
    %v152 = vld [vmem:[#allocation11 + $0x34] sm:$0xf]
    %v153 = vld [vmem:[#allocation11 + $0x38] sm:$0xf]
    %v154 = vld [vmem:[#allocation11 + $0x3c] sm:$0xf]
    %v155 = vld [vmem:[#allocation11 + $0x40] sm:$0xf]
    %v156 = vld [vmem:[#allocation11 + $0x44] sm:$0xf]
    %v157 = vld [vmem:[#allocation11 + $0x48] sm:$0xf]
    %v158 = vld [vmem:[#allocation11 + $0x4c] sm:$0xf]
    %v159 = vld [vmem:[#allocation11 + $0x50] sm:$0xf]
    %v160 = vld [vmem:[#allocation11 + $0x54] sm:$0xf]
    %v161 = vld [vmem:[#allocation11 + $0x58] sm:$0xf]
    %v162 = vld [vmem:[#allocation11 + $0x5c] sm:$0xf]
    %v163 = vld [vmem:[#allocation11 + $0x60] sm:$0xf]
    %v164 = vld [vmem:[#allocation11 + $0x64] sm:$0xf]
    %v165 = vld [vmem:[#allocation11 + $0x68] sm:$0xf]
    %v166 = vld [vmem:[#allocation11 + $0x6c] sm:$0xf]
    %v167 = vld [vmem:[#allocation11 + $0x70] sm:$0xf]
    %v168 = vld [vmem:[#allocation11 + $0x74] sm:$0xf]
    %v169 = vld [vmem:[#allocation11 + $0x78] sm:$0xf]
    %v170 = vld [vmem:[#allocation11 + $0x7c] sm:$0xf]
    %v171 = vld [vmem:[%s4] sm:$0x1]
    %v172 = vld [vmem:[%s4 + $0x1] sm:$0x1]
    %v173 = vld [vmem:[#allocation2] sm:$0xff]
    %v174 = vld [vmem:[#allocation3] sm:$0xff]
    %v175 = vld [vmem:[#allocation4] sm:$0xff]
    %v176 = vld [vmem:[#allocation5] sm:$0xff]
    %v177 = vpack.c.bf16 %v173, %v173
    %v194 = vunpack.c.l.b16 %v91
    %v195 = vunpack.c.l.b16 %v92
    %v196 = vunpack.c.l.b16 %v93
    %v197 = vunpack.c.l.b16 %v94
    %v198 = vunpack.c.l.b16 %v95
    %v199 = vunpack.c.l.b16 %v96
    %v200 = vunpack.c.l.b16 %v97
    %v201 = vunpack.c.l.b16 %v98
    %v202 = vunpack.c.l.b16 %v99
    %v203 = vunpack.c.l.b16 %v100
    %v204 = vunpack.c.l.b16 %v101
    %v205 = vunpack.c.l.b16 %v102
    %v206 = vunpack.c.l.b16 %v103
    %v207 = vunpack.c.l.b16 %v104
    %v208 = vunpack.c.l.b16 %v105
    %v209 = vunpack.c.l.b16 %v106
    %v210 = vpack.c.b16 %v195, %v194
    %v211 = vpack.c.b16 %v197, %v196
    %v212 = vpack.c.b16 %v199, %v198
    %v213 = vpack.c.b16 %v201, %v200
    %v214 = vpack.c.b16 %v203, %v202
    %v215 = vpack.c.b16 %v205, %v204
    %v216 = vpack.c.b16 %v207, %v206
    %v217 = vpack.c.b16 %v209, %v208
    %226 = vmatpush.bf16.msra.mxu0 %v217
    %227 = vmatpush.bf16.msra.mxu0 %v216
    %228 = vmatpush.bf16.msra.mxu0 %v215
    %229 = vmatpush.bf16.msra.mxu0 %v214
    %230 = vmatpush.bf16.msra.mxu0 %v213
    %231 = vmatpush.bf16.msra.mxu0 %v212
    %232 = vmatpush.bf16.msra.mxu0 %v211
    %233 = vmatpush.bf16.msra.mxu0 %v210
    %234 = vmatmul.bf16.gmra.mxu0 %v177
    %v235 = vpop.f32.mrf.mxu0
    %v236 = vadd.f32 0.0, %v235
    %v237 = vpop.f32.mrf.mxu0
    %238 = vdwg.mxu0
    %v239 = vadd.f32 %v176, %v236
    %v240 = vtanh.pop %v239
    %v241 = vpack.c.bf16 %v240, %v240
    %v242 = vpack.c.bf16 %v174, %v174
    %v243 = vperm.slane %v171, 0
    %v276 = vunpack.c.l.b16 %v107
    %v277 = vunpack.c.l.b16 %v108
    %v278 = vunpack.c.l.b16 %v109
    %v279 = vunpack.c.l.b16 %v110
    %v280 = vunpack.c.l.b16 %v111
    %v281 = vunpack.c.l.b16 %v112
    %v282 = vunpack.c.l.b16 %v113
    %v283 = vunpack.c.l.b16 %v114
    %v284 = vunpack.c.l.b16 %v115
    %v285 = vunpack.c.l.b16 %v116
    %v286 = vunpack.c.l.b16 %v117
    %v287 = vunpack.c.l.b16 %v118
    %v288 = vunpack.c.l.b16 %v119
    %v289 = vunpack.c.l.b16 %v120
    %v290 = vunpack.c.l.b16 %v121
    %v291 = vunpack.c.l.b16 %v122
    %v292 = vunpack.c.l.b16 %v123
    %v293 = vunpack.c.l.b16 %v124
    %v294 = vunpack.c.l.b16 %v125
    %v295 = vunpack.c.l.b16 %v126
    %v296 = vunpack.c.l.b16 %v127
    %v297 = vunpack.c.l.b16 %v128
    %v298 = vunpack.c.l.b16 %v129
    %v299 = vunpack.c.l.b16 %v130
    %v300 = vunpack.c.l.b16 %v131
    %v301 = vunpack.c.l.b16 %v132
    %v302 = vunpack.c.l.b16 %v133
    %v303 = vunpack.c.l.b16 %v134
    %v304 = vunpack.c.l.b16 %v135
    %v305 = vunpack.c.l.b16 %v136
    %v306 = vunpack.c.l.b16 %v137
    %v307 = vunpack.c.l.b16 %v138
    %v308 = vpack.c.b16 %v277, %v276
    %v309 = vpack.c.b16 %v279, %v278
    %v310 = vpack.c.b16 %v281, %v280
    %v311 = vpack.c.b16 %v283, %v282
    %v312 = vpack.c.b16 %v285, %v284
    %v313 = vpack.c.b16 %v287, %v286
    %v314 = vpack.c.b16 %v289, %v288
    %v315 = vpack.c.b16 %v291, %v290
    %v316 = vpack.c.b16 %v293, %v292
    %v317 = vpack.c.b16 %v295, %v294
    %v318 = vpack.c.b16 %v297, %v296
    %v319 = vpack.c.b16 %v299, %v298
    %v320 = vpack.c.b16 %v301, %v300
    %v321 = vpack.c.b16 %v303, %v302
    %v322 = vpack.c.b16 %v305, %v304
    %v323 = vpack.c.b16 %v307, %v306
    %340 = vmatpush.bf16.msra.mxu0 %v315
    %341 = vmatpush.bf16.msra.mxu0 %v314
    %342 = vmatpush.bf16.msra.mxu0 %v313
    %343 = vmatpush.bf16.msra.mxu0 %v312
    %344 = vmatpush.bf16.msra.mxu0 %v311
    %345 = vmatpush.bf16.msra.mxu0 %v310
    %346 = vmatpush.bf16.msra.mxu0 %v309
    %347 = vmatpush.bf16.msra.mxu0 %v308
    %348 = vmatmul.bf16.gmra.mxu0 %v241
    %v349 = vpop.f32.mrf.mxu0
    %v350 = vadd.f32 %v243, %v349
    %v351 = vpop.f32.mrf.mxu0
    %352 = vdwg.mxu0
    %353 = vmatpush.bf16.msra.mxu0 %v323
    %354 = vmatpush.bf16.msra.mxu0 %v322
    %355 = vmatpush.bf16.msra.mxu0 %v321
    %356 = vmatpush.bf16.msra.mxu0 %v320
    %357 = vmatpush.bf16.msra.mxu0 %v319
    %358 = vmatpush.bf16.msra.mxu0 %v318
    %359 = vmatpush.bf16.msra.mxu0 %v317
    %360 = vmatpush.bf16.msra.mxu0 %v316
    %361 = vmatmul.bf16.gmra.mxu0 %v242
    %v362 = vpop.f32.mrf.mxu0
    %v363 = vadd.f32 %v350, %v362
    %v364 = vpop.f32.mrf.mxu0
    %365 = vdwg.mxu0
    %v366 = vtanh.pop %v363
    %v367 = vpack.c.bf16 %v366, %v366
    %v368 = vpack.c.bf16 %v175, %v175
    %v369 = vperm.slane %v172, 0
    %v402 = vunpack.c.l.b16 %v139
    %v403 = vunpack.c.l.b16 %v140
    %v404 = vunpack.c.l.b16 %v141
    %v405 = vunpack.c.l.b16 %v142
    %v406 = vunpack.c.l.b16 %v143
    %v407 = vunpack.c.l.b16 %v144
    %v408 = vunpack.c.l.b16 %v145
    %v409 = vunpack.c.l.b16 %v146
    %v410 = vunpack.c.l.b16 %v147
    %v411 = vunpack.c.l.b16 %v148
    %v412 = vunpack.c.l.b16 %v149
    %v413 = vunpack.c.l.b16 %v150
    %v414 = vunpack.c.l.b16 %v151
    %v415 = vunpack.c.l.b16 %v152
    %v416 = vunpack.c.l.b16 %v153
    %v417 = vunpack.c.l.b16 %v154
    %v418 = vunpack.c.l.b16 %v155
    %v419 = vunpack.c.l.b16 %v156
    %v420 = vunpack.c.l.b16 %v157
    %v421 = vunpack.c.l.b16 %v158
    %v422 = vunpack.c.l.b16 %v159
    %v423 = vunpack.c.l.b16 %v160
    %v424 = vunpack.c.l.b16 %v161
    %v425 = vunpack.c.l.b16 %v162
    %v426 = vunpack.c.l.b16 %v163
    %v427 = vunpack.c.l.b16 %v164
    %v428 = vunpack.c.l.b16 %v165
    %v429 = vunpack.c.l.b16 %v166
    %v430 = vunpack.c.l.b16 %v167
    %v431 = vunpack.c.l.b16 %v168
    %v432 = vunpack.c.l.b16 %v169
    %v433 = vunpack.c.l.b16 %v170
    %v434 = vpack.c.b16 %v403, %v402
    %v435 = vpack.c.b16 %v405, %v404
    %v436 = vpack.c.b16 %v407, %v406
    %v437 = vpack.c.b16 %v409, %v408
    %v438 = vpack.c.b16 %v411, %v410
    %v439 = vpack.c.b16 %v413, %v412
    %v440 = vpack.c.b16 %v415, %v414
    %v441 = vpack.c.b16 %v417, %v416
    %v442 = vpack.c.b16 %v419, %v418
    %v443 = vpack.c.b16 %v421, %v420
    %v444 = vpack.c.b16 %v423, %v422
    %v445 = vpack.c.b16 %v425, %v424
    %v446 = vpack.c.b16 %v427, %v426
    %v447 = vpack.c.b16 %v429, %v428
    %v448 = vpack.c.b16 %v431, %v430
    %v449 = vpack.c.b16 %v433, %v432
    %466 = vmatpush.bf16.msra.mxu0 %v441
    %467 = vmatpush.bf16.msra.mxu0 %v440
    %468 = vmatpush.bf16.msra.mxu0 %v439
    %469 = vmatpush.bf16.msra.mxu0 %v438
    %470 = vmatpush.bf16.msra.mxu0 %v437
    %471 = vmatpush.bf16.msra.mxu0 %v436
    %472 = vmatpush.bf16.msra.mxu0 %v435
    %473 = vmatpush.bf16.msra.mxu0 %v434
    %474 = vmatmul.bf16.gmra.mxu0 %v367
    %v475 = vpop.f32.mrf.mxu0
    %v476 = vadd.f32 %v369, %v475
    %v477 = vpop.f32.mrf.mxu0
    %478 = vdwg.mxu0
    %479 = vmatpush.bf16.msra.mxu0 %v449
    %480 = vmatpush.bf16.msra.mxu0 %v448
    %481 = vmatpush.bf16.msra.mxu0 %v447
    %482 = vmatpush.bf16.msra.mxu0 %v446
    %483 = vmatpush.bf16.msra.mxu0 %v445
    %484 = vmatpush.bf16.msra.mxu0 %v444
    %485 = vmatpush.bf16.msra.mxu0 %v443
    %486 = vmatpush.bf16.msra.mxu0 %v442
    %487 = vmatmul.bf16.gmra.mxu0 %v368
    %v488 = vpop.f32.mrf.mxu0
    %v489 = vadd.f32 %v476, %v488
    %v490 = vpop.f32.mrf.mxu0
    %491 = vdwg.mxu0
    %v492 = vtanh.pop %v489
    %493 = vst [vmem:[#allocation13] sm:$0xff] %v492
    %s494 = scalar_lea.vmem [#allocation5], 8
    %v495 = vld [vmem:[%s494] sm:$0xff]
    %496 = vmatpush.bf16.msra.mxu0 %v217
    %497 = vmatpush.bf16.msra.mxu0 %v216
    %498 = vmatpush.bf16.msra.mxu0 %v215
    %499 = vmatpush.bf16.msra.mxu0 %v214
    %500 = vmatpush.bf16.msra.mxu0 %v213
    %501 = vmatpush.bf16.msra.mxu0 %v212
    %502 = vmatpush.bf16.msra.mxu0 %v211
    %503 = vmatpush.bf16.msra.mxu0 %v210
    %504 = vmatmul.bf16.gmra.mxu0 %v241
    %v505 = vpop.f32.mrf.mxu0
    %v506 = vadd.f32 0.0, %v505
    %v507 = vpop.f32.mrf.mxu0
    %508 = vdwg.mxu0
    %v509 = vadd.f32 %v495, %v506
    %v510 = vtanh.pop %v509
    %v511 = vpack.c.bf16 %v510, %v510
    %512 = vmatpush.bf16.msra.mxu0 %v315
    %513 = vmatpush.bf16.msra.mxu0 %v314
    %514 = vmatpush.bf16.msra.mxu0 %v313
    %515 = vmatpush.bf16.msra.mxu0 %v312
    %516 = vmatpush.bf16.msra.mxu0 %v311
    %517 = vmatpush.bf16.msra.mxu0 %v310
    %518 = vmatpush.bf16.msra.mxu0 %v309
    %519 = vmatpush.bf16.msra.mxu0 %v308
    %520 = vmatmul.bf16.gmra.mxu0 %v511
    %v521 = vpop.f32.mrf.mxu0
    %v522 = vadd.f32 %v243, %v521
    %v523 = vpop.f32.mrf.mxu0
    %524 = vdwg.mxu0
    %525 = vmatpush.bf16.msra.mxu0 %v323
    %526 = vmatpush.bf16.msra.mxu0 %v322
    %527 = vmatpush.bf16.msra.mxu0 %v321
    %528 = vmatpush.bf16.msra.mxu0 %v320
    %529 = vmatpush.bf16.msra.mxu0 %v319
    %530 = vmatpush.bf16.msra.mxu0 %v318
    %531 = vmatpush.bf16.msra.mxu0 %v317
    %532 = vmatpush.bf16.msra.mxu0 %v316
    %533 = vmatmul.bf16.gmra.mxu0 %v367
    %v534 = vpop.f32.mrf.mxu0
    %v535 = vadd.f32 %v522, %v534
    %v536 = vpop.f32.mrf.mxu0
    %537 = vdwg.mxu0
    %v538 = vtanh.pop %v535
    %v539 = vpack.c.bf16 %v538, %v538
    %v540 = vpack.c.bf16 %v492, %v492
    %541 = vmatpush.bf16.msra.mxu0 %v441
    %542 = vmatpush.bf16.msra.mxu0 %v440
    %543 = vmatpush.bf16.msra.mxu0 %v439
    %544 = vmatpush.bf16.msra.mxu0 %v438
    %545 = vmatpush.bf16.msra.mxu0 %v437
    %546 = vmatpush.bf16.msra.mxu0 %v436
    %547 = vmatpush.bf16.msra.mxu0 %v435
    %548 = vmatpush.bf16.msra.mxu0 %v434
    %549 = vmatmul.bf16.gmra.mxu0 %v539
    %v550 = vpop.f32.mrf.mxu0
    %v551 = vadd.f32 %v369, %v550
    %v552 = vpop.f32.mrf.mxu0
    %553 = vdwg.mxu0
    %554 = vmatpush.bf16.msra.mxu0 %v449
    %555 = vmatpush.bf16.msra.mxu0 %v448
    %556 = vmatpush.bf16.msra.mxu0 %v447
    %557 = vmatpush.bf16.msra.mxu0 %v446
    %558 = vmatpush.bf16.msra.mxu0 %v445
    %559 = vmatpush.bf16.msra.mxu0 %v444
    %560 = vmatpush.bf16.msra.mxu0 %v443
    %561 = vmatpush.bf16.msra.mxu0 %v442
    %562 = vmatmul.bf16.gmra.mxu0 %v540
    %v563 = vpop.f32.mrf.mxu0
    %v564 = vadd.f32 %v551, %v563
    %v565 = vpop.f32.mrf.mxu0
    %566 = vdwg.mxu0
    %v567 = vtanh.pop %v564
    %s568 = scalar_lea.vmem [#allocation13], 8
    %569 = vst [vmem:[%s568] sm:$0xff] %v567
    %s570 = scalar_lea.vmem [#allocation5], 16
    %v571 = vld [vmem:[%s570] sm:$0xff]
    %572 = vmatpush.bf16.msra.mxu0 %v217
    %573 = vmatpush.bf16.msra.mxu0 %v216
    %574 = vmatpush.bf16.msra.mxu0 %v215
    %575 = vmatpush.bf16.msra.mxu0 %v214
    %576 = vmatpush.bf16.msra.mxu0 %v213
    %577 = vmatpush.bf16.msra.mxu0 %v212
    %578 = vmatpush.bf16.msra.mxu0 %v211
    %579 = vmatpush.bf16.msra.mxu0 %v210
    %580 = vmatmul.bf16.gmra.mxu0 %v511
    %v581 = vpop.f32.mrf.mxu0
    %v582 = vadd.f32 0.0, %v581
    %v583 = vpop.f32.mrf.mxu0
    %584 = vdwg.mxu0
    %v585 = vadd.f32 %v571, %v582
    %v586 = vtanh.pop %v585
    %v587 = vpack.c.bf16 %v586, %v586
    %588 = vmatpush.bf16.msra.mxu0 %v315
    %589 = vmatpush.bf16.msra.mxu0 %v314
    %590 = vmatpush.bf16.msra.mxu0 %v313
    %591 = vmatpush.bf16.msra.mxu0 %v312
    %592 = vmatpush.bf16.msra.mxu0 %v311
    %593 = vmatpush.bf16.msra.mxu0 %v310
    %594 = vmatpush.bf16.msra.mxu0 %v309
    %595 = vmatpush.bf16.msra.mxu0 %v308
    %596 = vmatmul.bf16.gmra.mxu0 %v587
    %v597 = vpop.f32.mrf.mxu0
    %v598 = vadd.f32 %v243, %v597
    %v599 = vpop.f32.mrf.mxu0
    %600 = vdwg.mxu0
    %601 = vmatpush.bf16.msra.mxu0 %v323
    %602 = vmatpush.bf16.msra.mxu0 %v322
    %603 = vmatpush.bf16.msra.mxu0 %v321
    %604 = vmatpush.bf16.msra.mxu0 %v320
    %605 = vmatpush.bf16.msra.mxu0 %v319
    %606 = vmatpush.bf16.msra.mxu0 %v318
    %607 = vmatpush.bf16.msra.mxu0 %v317
    %608 = vmatpush.bf16.msra.mxu0 %v316
    %609 = vmatmul.bf16.gmra.mxu0 %v539
    %v610 = vpop.f32.mrf.mxu0
    %v611 = vadd.f32 %v598, %v610
    %v612 = vpop.f32.mrf.mxu0
    %613 = vdwg.mxu0
    %v614 = vtanh.pop %v611
    %v615 = vpack.c.bf16 %v614, %v614
    %v616 = vpack.c.bf16 %v567, %v567
    %617 = vmatpush.bf16.msra.mxu0 %v441
    %618 = vmatpush.bf16.msra.mxu0 %v440
    %619 = vmatpush.bf16.msra.mxu0 %v439
    %620 = vmatpush.bf16.msra.mxu0 %v438
    %621 = vmatpush.bf16.msra.mxu0 %v437
    %622 = vmatpush.bf16.msra.mxu0 %v436
    %623 = vmatpush.bf16.msra.mxu0 %v435
    %624 = vmatpush.bf16.msra.mxu0 %v434
    %625 = vmatmul.bf16.gmra.mxu0 %v615
    %v626 = vpop.f32.mrf.mxu0
    %v627 = vadd.f32 %v369, %v626
    %v628 = vpop.f32.mrf.mxu0
    %629 = vdwg.mxu0
    %630 = vmatpush.bf16.msra.mxu0 %v449
    %631 = vmatpush.bf16.msra.mxu0 %v448
    %632 = vmatpush.bf16.msra.mxu0 %v447
    %633 = vmatpush.bf16.msra.mxu0 %v446
    %634 = vmatpush.bf16.msra.mxu0 %v445
    %635 = vmatpush.bf16.msra.mxu0 %v444
    %636 = vmatpush.bf16.msra.mxu0 %v443
    %637 = vmatpush.bf16.msra.mxu0 %v442
    %638 = vmatmul.bf16.gmra.mxu0 %v616
    %v639 = vpop.f32.mrf.mxu0
    %v640 = vadd.f32 %v627, %v639
    %v641 = vpop.f32.mrf.mxu0
    %642 = vdwg.mxu0
    %v643 = vtanh.pop %v640
    %s644 = scalar_lea.vmem [#allocation13], 16
    %645 = vst [vmem:[%s644] sm:$0xff] %v643
    %s646 = scalar_lea.vmem [#allocation5], 24
    %v647 = vld [vmem:[%s646] sm:$0xff]
    %648 = vmatpush.bf16.msra.mxu0 %v217
    %649 = vmatpush.bf16.msra.mxu0 %v216
    %650 = vmatpush.bf16.msra.mxu0 %v215
    %651 = vmatpush.bf16.msra.mxu0 %v214
    %652 = vmatpush.bf16.msra.mxu0 %v213
    %653 = vmatpush.bf16.msra.mxu0 %v212
    %654 = vmatpush.bf16.msra.mxu0 %v211
    %655 = vmatpush.bf16.msra.mxu0 %v210
    %656 = vmatmul.bf16.gmra.mxu0 %v587
    %v657 = vpop.f32.mrf.mxu0
    %v658 = vadd.f32 0.0, %v657
    %v659 = vpop.f32.mrf.mxu0
    %660 = vdwg.mxu0
    %v661 = vadd.f32 %v647, %v658
    %v662 = vtanh.pop %v661
    %v663 = vpack.c.bf16 %v662, %v662
    %664 = vmatpush.bf16.msra.mxu0 %v315
    %665 = vmatpush.bf16.msra.mxu0 %v314
    %666 = vmatpush.bf16.msra.mxu0 %v313
    %667 = vmatpush.bf16.msra.mxu0 %v312
    %668 = vmatpush.bf16.msra.mxu0 %v311
    %669 = vmatpush.bf16.msra.mxu0 %v310
    %670 = vmatpush.bf16.msra.mxu0 %v309
    %671 = vmatpush.bf16.msra.mxu0 %v308
    %672 = vmatmul.bf16.gmra.mxu0 %v663
    %v673 = vpop.f32.mrf.mxu0
    %v674 = vadd.f32 %v243, %v673
    %v675 = vpop.f32.mrf.mxu0
    %676 = vdwg.mxu0
    %677 = vmatpush.bf16.msra.mxu0 %v323
    %678 = vmatpush.bf16.msra.mxu0 %v322
    %679 = vmatpush.bf16.msra.mxu0 %v321
    %680 = vmatpush.bf16.msra.mxu0 %v320
    %681 = vmatpush.bf16.msra.mxu0 %v319
    %682 = vmatpush.bf16.msra.mxu0 %v318
    %683 = vmatpush.bf16.msra.mxu0 %v317
    %684 = vmatpush.bf16.msra.mxu0 %v316
    %685 = vmatmul.bf16.gmra.mxu0 %v615
    %v686 = vpop.f32.mrf.mxu0
    %v687 = vadd.f32 %v674, %v686
    %v688 = vpop.f32.mrf.mxu0
    %689 = vdwg.mxu0
    %v690 = vtanh.pop %v687
    %v691 = vpack.c.bf16 %v690, %v690
    %v692 = vpack.c.bf16 %v643, %v643
    %693 = vmatpush.bf16.msra.mxu0 %v441
    %694 = vmatpush.bf16.msra.mxu0 %v440
    %695 = vmatpush.bf16.msra.mxu0 %v439
    %696 = vmatpush.bf16.msra.mxu0 %v438
    %697 = vmatpush.bf16.msra.mxu0 %v437
    %698 = vmatpush.bf16.msra.mxu0 %v436
    %699 = vmatpush.bf16.msra.mxu0 %v435
    %700 = vmatpush.bf16.msra.mxu0 %v434
    %701 = vmatmul.bf16.gmra.mxu0 %v691
    %v702 = vpop.f32.mrf.mxu0
    %v703 = vadd.f32 %v369, %v702
    %v704 = vpop.f32.mrf.mxu0
    %705 = vdwg.mxu0
    %706 = vmatpush.bf16.msra.mxu0 %v449
    %707 = vmatpush.bf16.msra.mxu0 %v448
    %708 = vmatpush.bf16.msra.mxu0 %v447
    %709 = vmatpush.bf16.msra.mxu0 %v446
    %710 = vmatpush.bf16.msra.mxu0 %v445
    %711 = vmatpush.bf16.msra.mxu0 %v444
    %712 = vmatpush.bf16.msra.mxu0 %v443
    %713 = vmatpush.bf16.msra.mxu0 %v442
    %714 = vmatmul.bf16.gmra.mxu0 %v692
    %v715 = vpop.f32.mrf.mxu0
    %v716 = vadd.f32 %v703, %v715
    %v717 = vpop.f32.mrf.mxu0
    %718 = vdwg.mxu0
    %v719 = vtanh.pop %v716
    %s720 = scalar_lea.vmem [#allocation13], 24
    %721 = vst [vmem:[%s720] sm:$0xff] %v719
    %s722 = scalar_lea.vmem [#allocation5], 32
    %v723 = vld [vmem:[%s722] sm:$0xff]
    %724 = vmatpush.bf16.msra.mxu0 %v217
    %725 = vmatpush.bf16.msra.mxu0 %v216
    %726 = vmatpush.bf16.msra.mxu0 %v215
    %727 = vmatpush.bf16.msra.mxu0 %v214
    %728 = vmatpush.bf16.msra.mxu0 %v213
    %729 = vmatpush.bf16.msra.mxu0 %v212
    %730 = vmatpush.bf16.msra.mxu0 %v211
    %731 = vmatpush.bf16.msra.mxu0 %v210
    %732 = vmatmul.bf16.gmra.mxu0 %v663
    %v733 = vpop.f32.mrf.mxu0
    %v734 = vadd.f32 0.0, %v733
    %v735 = vpop.f32.mrf.mxu0
    %736 = vdwg.mxu0
    %v737 = vadd.f32 %v723, %v734
    %v738 = vtanh.pop %v737
    %v739 = vpack.c.bf16 %v738, %v738
    %740 = vmatpush.bf16.msra.mxu0 %v315
    %741 = vmatpush.bf16.msra.mxu0 %v314
    %742 = vmatpush.bf16.msra.mxu0 %v313
    %743 = vmatpush.bf16.msra.mxu0 %v312
    %744 = vmatpush.bf16.msra.mxu0 %v311
    %745 = vmatpush.bf16.msra.mxu0 %v310
    %746 = vmatpush.bf16.msra.mxu0 %v309
    %747 = vmatpush.bf16.msra.mxu0 %v308
    %748 = vmatmul.bf16.gmra.mxu0 %v739
    %v749 = vpop.f32.mrf.mxu0
    %v750 = vadd.f32 %v243, %v749
    %v751 = vpop.f32.mrf.mxu0
    %752 = vdwg.mxu0
    %753 = vmatpush.bf16.msra.mxu0 %v323
    %754 = vmatpush.bf16.msra.mxu0 %v322
    %755 = vmatpush.bf16.msra.mxu0 %v321
    %756 = vmatpush.bf16.msra.mxu0 %v320
    %757 = vmatpush.bf16.msra.mxu0 %v319
    %758 = vmatpush.bf16.msra.mxu0 %v318
    %759 = vmatpush.bf16.msra.mxu0 %v317
    %760 = vmatpush.bf16.msra.mxu0 %v316
    %761 = vmatmul.bf16.gmra.mxu0 %v691
    %v762 = vpop.f32.mrf.mxu0
    %v763 = vadd.f32 %v750, %v762
    %v764 = vpop.f32.mrf.mxu0
    %765 = vdwg.mxu0
    %v766 = vtanh.pop %v763
    %v767 = vpack.c.bf16 %v766, %v766
    %v768 = vpack.c.bf16 %v719, %v719
    %769 = vmatpush.bf16.msra.mxu0 %v441
    %770 = vmatpush.bf16.msra.mxu0 %v440
    %771 = vmatpush.bf16.msra.mxu0 %v439
    %772 = vmatpush.bf16.msra.mxu0 %v438
    %773 = vmatpush.bf16.msra.mxu0 %v437
    %774 = vmatpush.bf16.msra.mxu0 %v436
    %775 = vmatpush.bf16.msra.mxu0 %v435
    %776 = vmatpush.bf16.msra.mxu0 %v434
    %777 = vmatmul.bf16.gmra.mxu0 %v767
    %v778 = vpop.f32.mrf.mxu0
    %v779 = vadd.f32 %v369, %v778
    %v780 = vpop.f32.mrf.mxu0
    %781 = vdwg.mxu0
    %782 = vmatpush.bf16.msra.mxu0 %v449
    %783 = vmatpush.bf16.msra.mxu0 %v448
    %784 = vmatpush.bf16.msra.mxu0 %v447
    %785 = vmatpush.bf16.msra.mxu0 %v446
    %786 = vmatpush.bf16.msra.mxu0 %v445
    %787 = vmatpush.bf16.msra.mxu0 %v444
    %788 = vmatpush.bf16.msra.mxu0 %v443
    %789 = vmatpush.bf16.msra.mxu0 %v442
    %790 = vmatmul.bf16.gmra.mxu0 %v768
    %v791 = vpop.f32.mrf.mxu0
    %v792 = vadd.f32 %v779, %v791
    %v793 = vpop.f32.mrf.mxu0
    %794 = vdwg.mxu0
    %v795 = vtanh.pop %v792
    %s796 = scalar_lea.vmem [#allocation13], 32
    %797 = vst [vmem:[%s796] sm:$0xff] %v795
    %s798 = scalar_lea.vmem [#allocation5], 40
    %v799 = vld [vmem:[%s798] sm:$0xff]
    %800 = vmatpush.bf16.msra.mxu0 %v217
    %801 = vmatpush.bf16.msra.mxu0 %v216
    %802 = vmatpush.bf16.msra.mxu0 %v215
    %803 = vmatpush.bf16.msra.mxu0 %v214
    %804 = vmatpush.bf16.msra.mxu0 %v213
    %805 = vmatpush.bf16.msra.mxu0 %v212
    %806 = vmatpush.bf16.msra.mxu0 %v211
    %807 = vmatpush.bf16.msra.mxu0 %v210
    %808 = vmatmul.bf16.gmra.mxu0 %v739
    %v809 = vpop.f32.mrf.mxu0
    %v810 = vadd.f32 0.0, %v809
    %v811 = vpop.f32.mrf.mxu0
    %812 = vdwg.mxu0
    %v813 = vadd.f32 %v799, %v810
    %v814 = vtanh.pop %v813
    %v815 = vpack.c.bf16 %v814, %v814
    %816 = vmatpush.bf16.msra.mxu0 %v315
    %817 = vmatpush.bf16.msra.mxu0 %v314
    %818 = vmatpush.bf16.msra.mxu0 %v313
    %819 = vmatpush.bf16.msra.mxu0 %v312
    %820 = vmatpush.bf16.msra.mxu0 %v311
    %821 = vmatpush.bf16.msra.mxu0 %v310
    %822 = vmatpush.bf16.msra.mxu0 %v309
    %823 = vmatpush.bf16.msra.mxu0 %v308
    %824 = vmatmul.bf16.gmra.mxu0 %v815
    %v825 = vpop.f32.mrf.mxu0
    %v826 = vadd.f32 %v243, %v825
    %v827 = vpop.f32.mrf.mxu0
    %828 = vdwg.mxu0
    %829 = vmatpush.bf16.msra.mxu0 %v323
    %830 = vmatpush.bf16.msra.mxu0 %v322
    %831 = vmatpush.bf16.msra.mxu0 %v321
    %832 = vmatpush.bf16.msra.mxu0 %v320
    %833 = vmatpush.bf16.msra.mxu0 %v319
    %834 = vmatpush.bf16.msra.mxu0 %v318
    %835 = vmatpush.bf16.msra.mxu0 %v317
    %836 = vmatpush.bf16.msra.mxu0 %v316
    %837 = vmatmul.bf16.gmra.mxu0 %v767
    %v838 = vpop.f32.mrf.mxu0
    %v839 = vadd.f32 %v826, %v838
    %v840 = vpop.f32.mrf.mxu0
    %841 = vdwg.mxu0
    %v842 = vtanh.pop %v839
    %v843 = vpack.c.bf16 %v842, %v842
    %v844 = vpack.c.bf16 %v795, %v795
    %845 = vmatpush.bf16.msra.mxu0 %v441
    %846 = vmatpush.bf16.msra.mxu0 %v440
    %847 = vmatpush.bf16.msra.mxu0 %v439
    %848 = vmatpush.bf16.msra.mxu0 %v438
    %849 = vmatpush.bf16.msra.mxu0 %v437
    %850 = vmatpush.bf16.msra.mxu0 %v436
    %851 = vmatpush.bf16.msra.mxu0 %v435
    %852 = vmatpush.bf16.msra.mxu0 %v434
    %853 = vmatmul.bf16.gmra.mxu0 %v843
    %v854 = vpop.f32.mrf.mxu0
    %v855 = vadd.f32 %v369, %v854
    %v856 = vpop.f32.mrf.mxu0
    %857 = vdwg.mxu0
    %858 = vmatpush.bf16.msra.mxu0 %v449
    %859 = vmatpush.bf16.msra.mxu0 %v448
    %860 = vmatpush.bf16.msra.mxu0 %v447
    %861 = vmatpush.bf16.msra.mxu0 %v446
    %862 = vmatpush.bf16.msra.mxu0 %v445
    %863 = vmatpush.bf16.msra.mxu0 %v444
    %864 = vmatpush.bf16.msra.mxu0 %v443
    %865 = vmatpush.bf16.msra.mxu0 %v442
    %866 = vmatmul.bf16.gmra.mxu0 %v844
    %v867 = vpop.f32.mrf.mxu0
    %v868 = vadd.f32 %v855, %v867
    %v869 = vpop.f32.mrf.mxu0
    %870 = vdwg.mxu0
    %v871 = vtanh.pop %v868
    %s872 = scalar_lea.vmem [#allocation13], 40
    %873 = vst [vmem:[%s872] sm:$0xff] %v871
    %s874 = scalar_lea.vmem [#allocation5], 48
    %v875 = vld [vmem:[%s874] sm:$0xff]
    %876 = vmatpush.bf16.msra.mxu0 %v217
    %877 = vmatpush.bf16.msra.mxu0 %v216
    %878 = vmatpush.bf16.msra.mxu0 %v215
    %879 = vmatpush.bf16.msra.mxu0 %v214
    %880 = vmatpush.bf16.msra.mxu0 %v213
    %881 = vmatpush.bf16.msra.mxu0 %v212
    %882 = vmatpush.bf16.msra.mxu0 %v211
    %883 = vmatpush.bf16.msra.mxu0 %v210
    %884 = vmatmul.bf16.gmra.mxu0 %v815
    %v885 = vpop.f32.mrf.mxu0
    %v886 = vadd.f32 0.0, %v885
    %v887 = vpop.f32.mrf.mxu0
    %888 = vdwg.mxu0
    %v889 = vadd.f32 %v875, %v886
    %v890 = vtanh.pop %v889
    %v891 = vpack.c.bf16 %v890, %v890
    %892 = vmatpush.bf16.msra.mxu0 %v315
    %893 = vmatpush.bf16.msra.mxu0 %v314
    %894 = vmatpush.bf16.msra.mxu0 %v313
    %895 = vmatpush.bf16.msra.mxu0 %v312
    %896 = vmatpush.bf16.msra.mxu0 %v311
    %897 = vmatpush.bf16.msra.mxu0 %v310
    %898 = vmatpush.bf16.msra.mxu0 %v309
    %899 = vmatpush.bf16.msra.mxu0 %v308
    %900 = vmatmul.bf16.gmra.mxu0 %v891
    %v901 = vpop.f32.mrf.mxu0
    %v902 = vadd.f32 %v243, %v901
    %v903 = vpop.f32.mrf.mxu0
    %904 = vdwg.mxu0
    %905 = vmatpush.bf16.msra.mxu0 %v323
    %906 = vmatpush.bf16.msra.mxu0 %v322
    %907 = vmatpush.bf16.msra.mxu0 %v321
    %908 = vmatpush.bf16.msra.mxu0 %v320
    %909 = vmatpush.bf16.msra.mxu0 %v319
    %910 = vmatpush.bf16.msra.mxu0 %v318
    %911 = vmatpush.bf16.msra.mxu0 %v317
    %912 = vmatpush.bf16.msra.mxu0 %v316
    %913 = vmatmul.bf16.gmra.mxu0 %v843
    %v914 = vpop.f32.mrf.mxu0
    %v915 = vadd.f32 %v902, %v914
    %v916 = vpop.f32.mrf.mxu0
    %917 = vdwg.mxu0
    %v918 = vtanh.pop %v915
    %v919 = vpack.c.bf16 %v918, %v918
    %v920 = vpack.c.bf16 %v871, %v871
    %921 = vmatpush.bf16.msra.mxu0 %v441
    %922 = vmatpush.bf16.msra.mxu0 %v440
    %923 = vmatpush.bf16.msra.mxu0 %v439
    %924 = vmatpush.bf16.msra.mxu0 %v438
    %925 = vmatpush.bf16.msra.mxu0 %v437
    %926 = vmatpush.bf16.msra.mxu0 %v436
    %927 = vmatpush.bf16.msra.mxu0 %v435
    %928 = vmatpush.bf16.msra.mxu0 %v434
    %929 = vmatmul.bf16.gmra.mxu0 %v919
    %v930 = vpop.f32.mrf.mxu0
    %v931 = vadd.f32 %v369, %v930
    %v932 = vpop.f32.mrf.mxu0
    %933 = vdwg.mxu0
    %934 = vmatpush.bf16.msra.mxu0 %v449
    %935 = vmatpush.bf16.msra.mxu0 %v448
    %936 = vmatpush.bf16.msra.mxu0 %v447
    %937 = vmatpush.bf16.msra.mxu0 %v446
    %938 = vmatpush.bf16.msra.mxu0 %v445
    %939 = vmatpush.bf16.msra.mxu0 %v444
    %940 = vmatpush.bf16.msra.mxu0 %v443
    %941 = vmatpush.bf16.msra.mxu0 %v442
    %942 = vmatmul.bf16.gmra.mxu0 %v920
    %v943 = vpop.f32.mrf.mxu0
    %v944 = vadd.f32 %v931, %v943
    %v945 = vpop.f32.mrf.mxu0
    %946 = vdwg.mxu0
    %v947 = vtanh.pop %v944
    %s948 = scalar_lea.vmem [#allocation13], 48
    %949 = vst [vmem:[%s948] sm:$0xff] %v947
    %s950 = scalar_lea.vmem [#allocation5], 56
    %v951 = vld [vmem:[%s950] sm:$0xff]
    %952 = vmatpush.bf16.msra.mxu0 %v217
    %953 = vmatpush.bf16.msra.mxu0 %v216
    %954 = vmatpush.bf16.msra.mxu0 %v215
    %955 = vmatpush.bf16.msra.mxu0 %v214
    %956 = vmatpush.bf16.msra.mxu0 %v213
    %957 = vmatpush.bf16.msra.mxu0 %v212
    %958 = vmatpush.bf16.msra.mxu0 %v211
    %959 = vmatpush.bf16.msra.mxu0 %v210
    %960 = vmatmul.bf16.gmra.mxu0 %v891
    %v961 = vpop.f32.mrf.mxu0
    %v962 = vadd.f32 0.0, %v961
    %v963 = vpop.f32.mrf.mxu0
    %964 = vdwg.mxu0
    %v965 = vadd.f32 %v951, %v962
    %v966 = vtanh.pop %v965
    %v967 = vpack.c.bf16 %v966, %v966
    %968 = vmatpush.bf16.msra.mxu0 %v315
    %969 = vmatpush.bf16.msra.mxu0 %v314
    %970 = vmatpush.bf16.msra.mxu0 %v313
    %971 = vmatpush.bf16.msra.mxu0 %v312
    %972 = vmatpush.bf16.msra.mxu0 %v311
    %973 = vmatpush.bf16.msra.mxu0 %v310
    %974 = vmatpush.bf16.msra.mxu0 %v309
    %975 = vmatpush.bf16.msra.mxu0 %v308
    %976 = vmatmul.bf16.gmra.mxu0 %v967
    %v977 = vpop.f32.mrf.mxu0
    %v978 = vadd.f32 %v243, %v977
    %v979 = vpop.f32.mrf.mxu0
    %980 = vdwg.mxu0
    %981 = vmatpush.bf16.msra.mxu0 %v323
    %982 = vmatpush.bf16.msra.mxu0 %v322
    %983 = vmatpush.bf16.msra.mxu0 %v321
    %984 = vmatpush.bf16.msra.mxu0 %v320
    %985 = vmatpush.bf16.msra.mxu0 %v319
    %986 = vmatpush.bf16.msra.mxu0 %v318
    %987 = vmatpush.bf16.msra.mxu0 %v317
    %988 = vmatpush.bf16.msra.mxu0 %v316
    %989 = vmatmul.bf16.gmra.mxu0 %v919
    %v990 = vpop.f32.mrf.mxu0
    %v991 = vadd.f32 %v978, %v990
    %v992 = vpop.f32.mrf.mxu0
    %993 = vdwg.mxu0
    %v994 = vtanh.pop %v991
    %v995 = vpack.c.bf16 %v994, %v994
    %v996 = vpack.c.bf16 %v947, %v947
    %997 = vmatpush.bf16.msra.mxu0 %v441
    %998 = vmatpush.bf16.msra.mxu0 %v440
    %999 = vmatpush.bf16.msra.mxu0 %v439
    %1000 = vmatpush.bf16.msra.mxu0 %v438
    %1001 = vmatpush.bf16.msra.mxu0 %v437
    %1002 = vmatpush.bf16.msra.mxu0 %v436
    %1003 = vmatpush.bf16.msra.mxu0 %v435
    %1004 = vmatpush.bf16.msra.mxu0 %v434
    %1005 = vmatmul.bf16.gmra.mxu0 %v995
    %v1006 = vpop.f32.mrf.mxu0
    %v1007 = vadd.f32 %v369, %v1006
    %v1008 = vpop.f32.mrf.mxu0
    %1009 = vdwg.mxu0
    %1010 = vmatpush.bf16.msra.mxu0 %v449
    %1011 = vmatpush.bf16.msra.mxu0 %v448
    %1012 = vmatpush.bf16.msra.mxu0 %v447
    %1013 = vmatpush.bf16.msra.mxu0 %v446
    %1014 = vmatpush.bf16.msra.mxu0 %v445
    %1015 = vmatpush.bf16.msra.mxu0 %v444
    %1016 = vmatpush.bf16.msra.mxu0 %v443
    %1017 = vmatpush.bf16.msra.mxu0 %v442
    %1018 = vmatmul.bf16.gmra.mxu0 %v996
    %v1019 = vpop.f32.mrf.mxu0
    %v1020 = vadd.f32 %v1007, %v1019
    %v1021 = vpop.f32.mrf.mxu0
    %1022 = vdwg.mxu0
    %v1023 = vtanh.pop %v1020
    %s1024 = scalar_lea.vmem [#allocation13], 56
    %1025 = vst [vmem:[%s1024] sm:$0xff] %v1023
    %s1026 = scalar_lea.vmem [#allocation5], 64
    %v1027 = vld [vmem:[%s1026] sm:$0xff]
    %1028 = vmatpush.bf16.msra.mxu0 %v217
    %1029 = vmatpush.bf16.msra.mxu0 %v216
    %1030 = vmatpush.bf16.msra.mxu0 %v215
    %1031 = vmatpush.bf16.msra.mxu0 %v214
    %1032 = vmatpush.bf16.msra.mxu0 %v213
    %1033 = vmatpush.bf16.msra.mxu0 %v212
    %1034 = vmatpush.bf16.msra.mxu0 %v211
    %1035 = vmatpush.bf16.msra.mxu0 %v210
    %1036 = vmatmul.bf16.gmra.mxu0 %v967
    %v1037 = vpop.f32.mrf.mxu0
    %v1038 = vadd.f32 0.0, %v1037
    %v1039 = vpop.f32.mrf.mxu0
    %1040 = vdwg.mxu0
    %v1041 = vadd.f32 %v1027, %v1038
    %v1042 = vtanh.pop %v1041
    %v1043 = vpack.c.bf16 %v1042, %v1042
    %1044 = vmatpush.bf16.msra.mxu0 %v315
    %1045 = vmatpush.bf16.msra.mxu0 %v314
    %1046 = vmatpush.bf16.msra.mxu0 %v313
    %1047 = vmatpush.bf16.msra.mxu0 %v312
    %1048 = vmatpush.bf16.msra.mxu0 %v311
    %1049 = vmatpush.bf16.msra.mxu0 %v310
    %1050 = vmatpush.bf16.msra.mxu0 %v309
    %1051 = vmatpush.bf16.msra.mxu0 %v308
    %1052 = vmatmul.bf16.gmra.mxu0 %v1043
    %v1053 = vpop.f32.mrf.mxu0
    %v1054 = vadd.f32 %v243, %v1053
    %v1055 = vpop.f32.mrf.mxu0
    %1056 = vdwg.mxu0
    %1057 = vmatpush.bf16.msra.mxu0 %v323
    %1058 = vmatpush.bf16.msra.mxu0 %v322
    %1059 = vmatpush.bf16.msra.mxu0 %v321
    %1060 = vmatpush.bf16.msra.mxu0 %v320
    %1061 = vmatpush.bf16.msra.mxu0 %v319
    %1062 = vmatpush.bf16.msra.mxu0 %v318
    %1063 = vmatpush.bf16.msra.mxu0 %v317
    %1064 = vmatpush.bf16.msra.mxu0 %v316
    %1065 = vmatmul.bf16.gmra.mxu0 %v995
    %v1066 = vpop.f32.mrf.mxu0
    %v1067 = vadd.f32 %v1054, %v1066
    %v1068 = vpop.f32.mrf.mxu0
    %1069 = vdwg.mxu0
    %v1070 = vtanh.pop %v1067
    %v1071 = vpack.c.bf16 %v1070, %v1070
    %v1072 = vpack.c.bf16 %v1023, %v1023
    %1073 = vmatpush.bf16.msra.mxu0 %v441
    %1074 = vmatpush.bf16.msra.mxu0 %v440
    %1075 = vmatpush.bf16.msra.mxu0 %v439
    %1076 = vmatpush.bf16.msra.mxu0 %v438
    %1077 = vmatpush.bf16.msra.mxu0 %v437
    %1078 = vmatpush.bf16.msra.mxu0 %v436
    %1079 = vmatpush.bf16.msra.mxu0 %v435
    %1080 = vmatpush.bf16.msra.mxu0 %v434
    %1081 = vmatmul.bf16.gmra.mxu0 %v1071
    %v1082 = vpop.f32.mrf.mxu0
    %v1083 = vadd.f32 %v369, %v1082
    %v1084 = vpop.f32.mrf.mxu0
    %1085 = vdwg.mxu0
    %1086 = vmatpush.bf16.msra.mxu0 %v449
    %1087 = vmatpush.bf16.msra.mxu0 %v448
    %1088 = vmatpush.bf16.msra.mxu0 %v447
    %1089 = vmatpush.bf16.msra.mxu0 %v446
    %1090 = vmatpush.bf16.msra.mxu0 %v445
    %1091 = vmatpush.bf16.msra.mxu0 %v444
    %1092 = vmatpush.bf16.msra.mxu0 %v443
    %1093 = vmatpush.bf16.msra.mxu0 %v442
    %1094 = vmatmul.bf16.gmra.mxu0 %v1072
    %v1095 = vpop.f32.mrf.mxu0
    %v1096 = vadd.f32 %v1083, %v1095
    %v1097 = vpop.f32.mrf.mxu0
    %1098 = vdwg.mxu0
    %v1099 = vtanh.pop %v1096
    %s1100 = scalar_lea.vmem [#allocation13], 64
    %1101 = vst [vmem:[%s1100] sm:$0xff] %v1099
    %s1102 = scalar_lea.vmem [#allocation5], 72
    %v1103 = vld [vmem:[%s1102] sm:$0xff]
    %1104 = vmatpush.bf16.msra.mxu0 %v217
    %1105 = vmatpush.bf16.msra.mxu0 %v216
    %1106 = vmatpush.bf16.msra.mxu0 %v215
    %1107 = vmatpush.bf16.msra.mxu0 %v214
    %1108 = vmatpush.bf16.msra.mxu0 %v213
    %1109 = vmatpush.bf16.msra.mxu0 %v212
    %1110 = vmatpush.bf16.msra.mxu0 %v211
    %1111 = vmatpush.bf16.msra.mxu0 %v210
    %1112 = vmatmul.bf16.gmra.mxu0 %v1043
    %v1113 = vpop.f32.mrf.mxu0
    %v1114 = vadd.f32 0.0, %v1113
    %v1115 = vpop.f32.mrf.mxu0
    %1116 = vdwg.mxu0
    %v1117 = vadd.f32 %v1103, %v1114
    %v1118 = vtanh.pop %v1117
    %v1119 = vpack.c.bf16 %v1118, %v1118
    %1120 = vmatpush.bf16.msra.mxu0 %v315
    %1121 = vmatpush.bf16.msra.mxu0 %v314
    %1122 = vmatpush.bf16.msra.mxu0 %v313
    %1123 = vmatpush.bf16.msra.mxu0 %v312
    %1124 = vmatpush.bf16.msra.mxu0 %v311
    %1125 = vmatpush.bf16.msra.mxu0 %v310
    %1126 = vmatpush.bf16.msra.mxu0 %v309
    %1127 = vmatpush.bf16.msra.mxu0 %v308
    %1128 = vmatmul.bf16.gmra.mxu0 %v1119
    %v1129 = vpop.f32.mrf.mxu0
    %v1130 = vadd.f32 %v243, %v1129
    %v1131 = vpop.f32.mrf.mxu0
    %1132 = vdwg.mxu0
    %1133 = vmatpush.bf16.msra.mxu0 %v323
    %1134 = vmatpush.bf16.msra.mxu0 %v322
    %1135 = vmatpush.bf16.msra.mxu0 %v321
    %1136 = vmatpush.bf16.msra.mxu0 %v320
    %1137 = vmatpush.bf16.msra.mxu0 %v319
    %1138 = vmatpush.bf16.msra.mxu0 %v318
    %1139 = vmatpush.bf16.msra.mxu0 %v317
    %1140 = vmatpush.bf16.msra.mxu0 %v316
    %1141 = vmatmul.bf16.gmra.mxu0 %v1071
    %v1142 = vpop.f32.mrf.mxu0
    %v1143 = vadd.f32 %v1130, %v1142
    %v1144 = vpop.f32.mrf.mxu0
    %1145 = vdwg.mxu0
    %v1146 = vtanh.pop %v1143
    %v1147 = vpack.c.bf16 %v1146, %v1146
    %v1148 = vpack.c.bf16 %v1099, %v1099
    %1149 = vmatpush.bf16.msra.mxu0 %v441
    %1150 = vmatpush.bf16.msra.mxu0 %v440
    %1151 = vmatpush.bf16.msra.mxu0 %v439
    %1152 = vmatpush.bf16.msra.mxu0 %v438
    %1153 = vmatpush.bf16.msra.mxu0 %v437
    %1154 = vmatpush.bf16.msra.mxu0 %v436
    %1155 = vmatpush.bf16.msra.mxu0 %v435
    %1156 = vmatpush.bf16.msra.mxu0 %v434
    %1157 = vmatmul.bf16.gmra.mxu0 %v1147
    %v1158 = vpop.f32.mrf.mxu0
    %v1159 = vadd.f32 %v369, %v1158
    %v1160 = vpop.f32.mrf.mxu0
    %1161 = vdwg.mxu0
    %1162 = vmatpush.bf16.msra.mxu0 %v449
    %1163 = vmatpush.bf16.msra.mxu0 %v448
    %1164 = vmatpush.bf16.msra.mxu0 %v447
    %1165 = vmatpush.bf16.msra.mxu0 %v446
    %1166 = vmatpush.bf16.msra.mxu0 %v445
    %1167 = vmatpush.bf16.msra.mxu0 %v444
    %1168 = vmatpush.bf16.msra.mxu0 %v443
    %1169 = vmatpush.bf16.msra.mxu0 %v442
    %1170 = vmatmul.bf16.gmra.mxu0 %v1148
    %v1171 = vpop.f32.mrf.mxu0
    %v1172 = vadd.f32 %v1159, %v1171
    %v1173 = vpop.f32.mrf.mxu0
    %1174 = vdwg.mxu0
    %v1175 = vtanh.pop %v1172
    %s1176 = scalar_lea.vmem [#allocation13], 72
    %1177 = vst [vmem:[%s1176] sm:$0xff] %v1175
    %s1178 = scalar_lea.vmem [#allocation5], 80
    %v1179 = vld [vmem:[%s1178] sm:$0xff]
    %1180 = vmatpush.bf16.msra.mxu0 %v217
    %1181 = vmatpush.bf16.msra.mxu0 %v216
    %1182 = vmatpush.bf16.msra.mxu0 %v215
    %1183 = vmatpush.bf16.msra.mxu0 %v214
    %1184 = vmatpush.bf16.msra.mxu0 %v213
    %1185 = vmatpush.bf16.msra.mxu0 %v212
    %1186 = vmatpush.bf16.msra.mxu0 %v211
    %1187 = vmatpush.bf16.msra.mxu0 %v210
    %1188 = vmatmul.bf16.gmra.mxu0 %v1119
    %v1189 = vpop.f32.mrf.mxu0
    %v1190 = vadd.f32 0.0, %v1189
    %v1191 = vpop.f32.mrf.mxu0
    %1192 = vdwg.mxu0
    %v1193 = vadd.f32 %v1179, %v1190
    %v1194 = vtanh.pop %v1193
    %v1195 = vpack.c.bf16 %v1194, %v1194
    %1196 = vmatpush.bf16.msra.mxu0 %v315
    %1197 = vmatpush.bf16.msra.mxu0 %v314
    %1198 = vmatpush.bf16.msra.mxu0 %v313
    %1199 = vmatpush.bf16.msra.mxu0 %v312
    %1200 = vmatpush.bf16.msra.mxu0 %v311
    %1201 = vmatpush.bf16.msra.mxu0 %v310
    %1202 = vmatpush.bf16.msra.mxu0 %v309
    %1203 = vmatpush.bf16.msra.mxu0 %v308
    %1204 = vmatmul.bf16.gmra.mxu0 %v1195
    %v1205 = vpop.f32.mrf.mxu0
    %v1206 = vadd.f32 %v243, %v1205
    %v1207 = vpop.f32.mrf.mxu0
    %1208 = vdwg.mxu0
    %1209 = vmatpush.bf16.msra.mxu0 %v323
    %1210 = vmatpush.bf16.msra.mxu0 %v322
    %1211 = vmatpush.bf16.msra.mxu0 %v321
    %1212 = vmatpush.bf16.msra.mxu0 %v320
    %1213 = vmatpush.bf16.msra.mxu0 %v319
    %1214 = vmatpush.bf16.msra.mxu0 %v318
    %1215 = vmatpush.bf16.msra.mxu0 %v317
    %1216 = vmatpush.bf16.msra.mxu0 %v316
    %1217 = vmatmul.bf16.gmra.mxu0 %v1147
    %v1218 = vpop.f32.mrf.mxu0
    %v1219 = vadd.f32 %v1206, %v1218
    %v1220 = vpop.f32.mrf.mxu0
    %1221 = vdwg.mxu0
    %v1222 = vtanh.pop %v1219
    %v1223 = vpack.c.bf16 %v1222, %v1222
    %v1224 = vpack.c.bf16 %v1175, %v1175
    %1225 = vmatpush.bf16.msra.mxu0 %v441
    %1226 = vmatpush.bf16.msra.mxu0 %v440
    %1227 = vmatpush.bf16.msra.mxu0 %v439
    %1228 = vmatpush.bf16.msra.mxu0 %v438
    %1229 = vmatpush.bf16.msra.mxu0 %v437
    %1230 = vmatpush.bf16.msra.mxu0 %v436
    %1231 = vmatpush.bf16.msra.mxu0 %v435
    %1232 = vmatpush.bf16.msra.mxu0 %v434
    %1233 = vmatmul.bf16.gmra.mxu0 %v1223
    %v1234 = vpop.f32.mrf.mxu0
    %v1235 = vadd.f32 %v369, %v1234
    %v1236 = vpop.f32.mrf.mxu0
    %1237 = vdwg.mxu0
    %1238 = vmatpush.bf16.msra.mxu0 %v449
    %1239 = vmatpush.bf16.msra.mxu0 %v448
    %1240 = vmatpush.bf16.msra.mxu0 %v447
    %1241 = vmatpush.bf16.msra.mxu0 %v446
    %1242 = vmatpush.bf16.msra.mxu0 %v445
    %1243 = vmatpush.bf16.msra.mxu0 %v444
    %1244 = vmatpush.bf16.msra.mxu0 %v443
    %1245 = vmatpush.bf16.msra.mxu0 %v442
    %1246 = vmatmul.bf16.gmra.mxu0 %v1224
    %v1247 = vpop.f32.mrf.mxu0
    %v1248 = vadd.f32 %v1235, %v1247
    %v1249 = vpop.f32.mrf.mxu0
    %1250 = vdwg.mxu0
    %v1251 = vtanh.pop %v1248
    %s1252 = scalar_lea.vmem [#allocation13], 80
    %1253 = vst [vmem:[%s1252] sm:$0xff] %v1251
    %s1254 = scalar_lea.vmem [#allocation5], 88
    %v1255 = vld [vmem:[%s1254] sm:$0xff]
    %1256 = vmatpush.bf16.msra.mxu0 %v217
    %1257 = vmatpush.bf16.msra.mxu0 %v216
    %1258 = vmatpush.bf16.msra.mxu0 %v215
    %1259 = vmatpush.bf16.msra.mxu0 %v214
    %1260 = vmatpush.bf16.msra.mxu0 %v213
    %1261 = vmatpush.bf16.msra.mxu0 %v212
    %1262 = vmatpush.bf16.msra.mxu0 %v211
    %1263 = vmatpush.bf16.msra.mxu0 %v210
    %1264 = vmatmul.bf16.gmra.mxu0 %v1195
    %v1265 = vpop.f32.mrf.mxu0
    %v1266 = vadd.f32 0.0, %v1265
    %v1267 = vpop.f32.mrf.mxu0
    %1268 = vdwg.mxu0
    %v1269 = vadd.f32 %v1255, %v1266
    %v1270 = vtanh.pop %v1269
    %v1271 = vpack.c.bf16 %v1270, %v1270
    %1272 = vmatpush.bf16.msra.mxu0 %v315
    %1273 = vmatpush.bf16.msra.mxu0 %v314
    %1274 = vmatpush.bf16.msra.mxu0 %v313
    %1275 = vmatpush.bf16.msra.mxu0 %v312
    %1276 = vmatpush.bf16.msra.mxu0 %v311
    %1277 = vmatpush.bf16.msra.mxu0 %v310
    %1278 = vmatpush.bf16.msra.mxu0 %v309
    %1279 = vmatpush.bf16.msra.mxu0 %v308
    %1280 = vmatmul.bf16.gmra.mxu0 %v1271
    %v1281 = vpop.f32.mrf.mxu0
    %v1282 = vadd.f32 %v243, %v1281
    %v1283 = vpop.f32.mrf.mxu0
    %1284 = vdwg.mxu0
    %1285 = vmatpush.bf16.msra.mxu0 %v323
    %1286 = vmatpush.bf16.msra.mxu0 %v322
    %1287 = vmatpush.bf16.msra.mxu0 %v321
    %1288 = vmatpush.bf16.msra.mxu0 %v320
    %1289 = vmatpush.bf16.msra.mxu0 %v319
    %1290 = vmatpush.bf16.msra.mxu0 %v318
    %1291 = vmatpush.bf16.msra.mxu0 %v317
    %1292 = vmatpush.bf16.msra.mxu0 %v316
    %1293 = vmatmul.bf16.gmra.mxu0 %v1223
    %v1294 = vpop.f32.mrf.mxu0
    %v1295 = vadd.f32 %v1282, %v1294
    %v1296 = vpop.f32.mrf.mxu0
    %1297 = vdwg.mxu0
    %v1298 = vtanh.pop %v1295
    %v1299 = vpack.c.bf16 %v1298, %v1298
    %v1300 = vpack.c.bf16 %v1251, %v1251
    %1301 = vmatpush.bf16.msra.mxu0 %v441
    %1302 = vmatpush.bf16.msra.mxu0 %v440
    %1303 = vmatpush.bf16.msra.mxu0 %v439
    %1304 = vmatpush.bf16.msra.mxu0 %v438
    %1305 = vmatpush.bf16.msra.mxu0 %v437
    %1306 = vmatpush.bf16.msra.mxu0 %v436
    %1307 = vmatpush.bf16.msra.mxu0 %v435
    %1308 = vmatpush.bf16.msra.mxu0 %v434
    %1309 = vmatmul.bf16.gmra.mxu0 %v1299
    %v1310 = vpop.f32.mrf.mxu0
    %v1311 = vadd.f32 %v369, %v1310
    %v1312 = vpop.f32.mrf.mxu0
    %1313 = vdwg.mxu0
    %1314 = vmatpush.bf16.msra.mxu0 %v449
    %1315 = vmatpush.bf16.msra.mxu0 %v448
    %1316 = vmatpush.bf16.msra.mxu0 %v447
    %1317 = vmatpush.bf16.msra.mxu0 %v446
    %1318 = vmatpush.bf16.msra.mxu0 %v445
    %1319 = vmatpush.bf16.msra.mxu0 %v444
    %1320 = vmatpush.bf16.msra.mxu0 %v443
    %1321 = vmatpush.bf16.msra.mxu0 %v442
    %1322 = vmatmul.bf16.gmra.mxu0 %v1300
    %v1323 = vpop.f32.mrf.mxu0
    %v1324 = vadd.f32 %v1311, %v1323
    %v1325 = vpop.f32.mrf.mxu0
    %1326 = vdwg.mxu0
    %v1327 = vtanh.pop %v1324
    %s1328 = scalar_lea.vmem [#allocation13], 88
    %1329 = vst [vmem:[%s1328] sm:$0xff] %v1327
    %s1330 = scalar_lea.vmem [#allocation5], 96
    %v1331 = vld [vmem:[%s1330] sm:$0xff]
    %1332 = vmatpush.bf16.msra.mxu0 %v217
    %1333 = vmatpush.bf16.msra.mxu0 %v216
    %1334 = vmatpush.bf16.msra.mxu0 %v215
    %1335 = vmatpush.bf16.msra.mxu0 %v214
    %1336 = vmatpush.bf16.msra.mxu0 %v213
    %1337 = vmatpush.bf16.msra.mxu0 %v212
    %1338 = vmatpush.bf16.msra.mxu0 %v211
    %1339 = vmatpush.bf16.msra.mxu0 %v210
    %1340 = vmatmul.bf16.gmra.mxu0 %v1271
    %v1341 = vpop.f32.mrf.mxu0
    %v1342 = vadd.f32 0.0, %v1341
    %v1343 = vpop.f32.mrf.mxu0
    %1344 = vdwg.mxu0
    %v1345 = vadd.f32 %v1331, %v1342
    %v1346 = vtanh.pop %v1345
    %v1347 = vpack.c.bf16 %v1346, %v1346
    %1348 = vmatpush.bf16.msra.mxu0 %v315
    %1349 = vmatpush.bf16.msra.mxu0 %v314
    %1350 = vmatpush.bf16.msra.mxu0 %v313
    %1351 = vmatpush.bf16.msra.mxu0 %v312
    %1352 = vmatpush.bf16.msra.mxu0 %v311
    %1353 = vmatpush.bf16.msra.mxu0 %v310
    %1354 = vmatpush.bf16.msra.mxu0 %v309
    %1355 = vmatpush.bf16.msra.mxu0 %v308
    %1356 = vmatmul.bf16.gmra.mxu0 %v1347
    %v1357 = vpop.f32.mrf.mxu0
    %v1358 = vadd.f32 %v243, %v1357
    %v1359 = vpop.f32.mrf.mxu0
    %1360 = vdwg.mxu0
    %1361 = vmatpush.bf16.msra.mxu0 %v323
    %1362 = vmatpush.bf16.msra.mxu0 %v322
    %1363 = vmatpush.bf16.msra.mxu0 %v321
    %1364 = vmatpush.bf16.msra.mxu0 %v320
    %1365 = vmatpush.bf16.msra.mxu0 %v319
    %1366 = vmatpush.bf16.msra.mxu0 %v318
    %1367 = vmatpush.bf16.msra.mxu0 %v317
    %1368 = vmatpush.bf16.msra.mxu0 %v316
    %1369 = vmatmul.bf16.gmra.mxu0 %v1299
    %v1370 = vpop.f32.mrf.mxu0
    %v1371 = vadd.f32 %v1358, %v1370
    %v1372 = vpop.f32.mrf.mxu0
    %1373 = vdwg.mxu0
    %v1374 = vtanh.pop %v1371
    %v1375 = vpack.c.bf16 %v1374, %v1374
    %v1376 = vpack.c.bf16 %v1327, %v1327
    %1377 = vmatpush.bf16.msra.mxu0 %v441
    %1378 = vmatpush.bf16.msra.mxu0 %v440
    %1379 = vmatpush.bf16.msra.mxu0 %v439
    %1380 = vmatpush.bf16.msra.mxu0 %v438
    %1381 = vmatpush.bf16.msra.mxu0 %v437
    %1382 = vmatpush.bf16.msra.mxu0 %v436
    %1383 = vmatpush.bf16.msra.mxu0 %v435
    %1384 = vmatpush.bf16.msra.mxu0 %v434
    %1385 = vmatmul.bf16.gmra.mxu0 %v1375
    %v1386 = vpop.f32.mrf.mxu0
    %v1387 = vadd.f32 %v369, %v1386
    %v1388 = vpop.f32.mrf.mxu0
    %1389 = vdwg.mxu0
    %1390 = vmatpush.bf16.msra.mxu0 %v449
    %1391 = vmatpush.bf16.msra.mxu0 %v448
    %1392 = vmatpush.bf16.msra.mxu0 %v447
    %1393 = vmatpush.bf16.msra.mxu0 %v446
    %1394 = vmatpush.bf16.msra.mxu0 %v445
    %1395 = vmatpush.bf16.msra.mxu0 %v444
    %1396 = vmatpush.bf16.msra.mxu0 %v443
    %1397 = vmatpush.bf16.msra.mxu0 %v442
    %1398 = vmatmul.bf16.gmra.mxu0 %v1376
    %v1399 = vpop.f32.mrf.mxu0
    %v1400 = vadd.f32 %v1387, %v1399
    %v1401 = vpop.f32.mrf.mxu0
    %1402 = vdwg.mxu0
    %v1403 = vtanh.pop %v1400
    %s1404 = scalar_lea.vmem [#allocation13], 96
    %1405 = vst [vmem:[%s1404] sm:$0xff] %v1403
    %s1406 = scalar_lea.vmem [#allocation5], 104
    %v1407 = vld [vmem:[%s1406] sm:$0xff]
    %1408 = vmatpush.bf16.msra.mxu0 %v217
    %1409 = vmatpush.bf16.msra.mxu0 %v216
    %1410 = vmatpush.bf16.msra.mxu0 %v215
    %1411 = vmatpush.bf16.msra.mxu0 %v214
    %1412 = vmatpush.bf16.msra.mxu0 %v213
    %1413 = vmatpush.bf16.msra.mxu0 %v212
    %1414 = vmatpush.bf16.msra.mxu0 %v211
    %1415 = vmatpush.bf16.msra.mxu0 %v210
    %1416 = vmatmul.bf16.gmra.mxu0 %v1347
    %v1417 = vpop.f32.mrf.mxu0
    %v1418 = vadd.f32 0.0, %v1417
    %v1419 = vpop.f32.mrf.mxu0
    %1420 = vdwg.mxu0
    %v1421 = vadd.f32 %v1407, %v1418
    %v1422 = vtanh.pop %v1421
    %v1423 = vpack.c.bf16 %v1422, %v1422
    %1424 = vmatpush.bf16.msra.mxu0 %v315
    %1425 = vmatpush.bf16.msra.mxu0 %v314
    %1426 = vmatpush.bf16.msra.mxu0 %v313
    %1427 = vmatpush.bf16.msra.mxu0 %v312
    %1428 = vmatpush.bf16.msra.mxu0 %v311
    %1429 = vmatpush.bf16.msra.mxu0 %v310
    %1430 = vmatpush.bf16.msra.mxu0 %v309
    %1431 = vmatpush.bf16.msra.mxu0 %v308
    %1432 = vmatmul.bf16.gmra.mxu0 %v1423
    %v1433 = vpop.f32.mrf.mxu0
    %v1434 = vadd.f32 %v243, %v1433
    %v1435 = vpop.f32.mrf.mxu0
    %1436 = vdwg.mxu0
    %1437 = vmatpush.bf16.msra.mxu0 %v323
    %1438 = vmatpush.bf16.msra.mxu0 %v322
    %1439 = vmatpush.bf16.msra.mxu0 %v321
    %1440 = vmatpush.bf16.msra.mxu0 %v320
    %1441 = vmatpush.bf16.msra.mxu0 %v319
    %1442 = vmatpush.bf16.msra.mxu0 %v318
    %1443 = vmatpush.bf16.msra.mxu0 %v317
    %1444 = vmatpush.bf16.msra.mxu0 %v316
    %1445 = vmatmul.bf16.gmra.mxu0 %v1375
    %v1446 = vpop.f32.mrf.mxu0
    %v1447 = vadd.f32 %v1434, %v1446
    %v1448 = vpop.f32.mrf.mxu0
    %1449 = vdwg.mxu0
    %v1450 = vtanh.pop %v1447
    %v1451 = vpack.c.bf16 %v1450, %v1450
    %v1452 = vpack.c.bf16 %v1403, %v1403
    %1453 = vmatpush.bf16.msra.mxu0 %v441
    %1454 = vmatpush.bf16.msra.mxu0 %v440
    %1455 = vmatpush.bf16.msra.mxu0 %v439
    %1456 = vmatpush.bf16.msra.mxu0 %v438
    %1457 = vmatpush.bf16.msra.mxu0 %v437
    %1458 = vmatpush.bf16.msra.mxu0 %v436
    %1459 = vmatpush.bf16.msra.mxu0 %v435
    %1460 = vmatpush.bf16.msra.mxu0 %v434
    %1461 = vmatmul.bf16.gmra.mxu0 %v1451
    %v1462 = vpop.f32.mrf.mxu0
    %v1463 = vadd.f32 %v369, %v1462
    %v1464 = vpop.f32.mrf.mxu0
    %1465 = vdwg.mxu0
    %1466 = vmatpush.bf16.msra.mxu0 %v449
    %1467 = vmatpush.bf16.msra.mxu0 %v448
    %1468 = vmatpush.bf16.msra.mxu0 %v447
    %1469 = vmatpush.bf16.msra.mxu0 %v446
    %1470 = vmatpush.bf16.msra.mxu0 %v445
    %1471 = vmatpush.bf16.msra.mxu0 %v444
    %1472 = vmatpush.bf16.msra.mxu0 %v443
    %1473 = vmatpush.bf16.msra.mxu0 %v442
    %1474 = vmatmul.bf16.gmra.mxu0 %v1452
    %v1475 = vpop.f32.mrf.mxu0
    %v1476 = vadd.f32 %v1463, %v1475
    %v1477 = vpop.f32.mrf.mxu0
    %1478 = vdwg.mxu0
    %v1479 = vtanh.pop %v1476
    %s1480 = scalar_lea.vmem [#allocation13], 104
    %1481 = vst [vmem:[%s1480] sm:$0xff] %v1479
    %s1482 = scalar_lea.vmem [#allocation5], 112
    %v1483 = vld [vmem:[%s1482] sm:$0xff]
    %1484 = vmatpush.bf16.msra.mxu0 %v217
    %1485 = vmatpush.bf16.msra.mxu0 %v216
    %1486 = vmatpush.bf16.msra.mxu0 %v215
    %1487 = vmatpush.bf16.msra.mxu0 %v214
    %1488 = vmatpush.bf16.msra.mxu0 %v213
    %1489 = vmatpush.bf16.msra.mxu0 %v212
    %1490 = vmatpush.bf16.msra.mxu0 %v211
    %1491 = vmatpush.bf16.msra.mxu0 %v210
    %1492 = vmatmul.bf16.gmra.mxu0 %v1423
    %v1493 = vpop.f32.mrf.mxu0
    %v1494 = vadd.f32 0.0, %v1493
    %v1495 = vpop.f32.mrf.mxu0
    %1496 = vdwg.mxu0
    %v1497 = vadd.f32 %v1483, %v1494
    %v1498 = vtanh.pop %v1497
    %v1499 = vpack.c.bf16 %v1498, %v1498
    %1500 = vmatpush.bf16.msra.mxu0 %v315
    %1501 = vmatpush.bf16.msra.mxu0 %v314
    %1502 = vmatpush.bf16.msra.mxu0 %v313
    %1503 = vmatpush.bf16.msra.mxu0 %v312
    %1504 = vmatpush.bf16.msra.mxu0 %v311
    %1505 = vmatpush.bf16.msra.mxu0 %v310
    %1506 = vmatpush.bf16.msra.mxu0 %v309
    %1507 = vmatpush.bf16.msra.mxu0 %v308
    %1508 = vmatmul.bf16.gmra.mxu0 %v1499
    %v1509 = vpop.f32.mrf.mxu0
    %v1510 = vadd.f32 %v243, %v1509
    %v1511 = vpop.f32.mrf.mxu0
    %1512 = vdwg.mxu0
    %1513 = vmatpush.bf16.msra.mxu0 %v323
    %1514 = vmatpush.bf16.msra.mxu0 %v322
    %1515 = vmatpush.bf16.msra.mxu0 %v321
    %1516 = vmatpush.bf16.msra.mxu0 %v320
    %1517 = vmatpush.bf16.msra.mxu0 %v319
    %1518 = vmatpush.bf16.msra.mxu0 %v318
    %1519 = vmatpush.bf16.msra.mxu0 %v317
    %1520 = vmatpush.bf16.msra.mxu0 %v316
    %1521 = vmatmul.bf16.gmra.mxu0 %v1451
    %v1522 = vpop.f32.mrf.mxu0
    %v1523 = vadd.f32 %v1510, %v1522
    %v1524 = vpop.f32.mrf.mxu0
    %1525 = vdwg.mxu0
    %v1526 = vtanh.pop %v1523
    %v1527 = vpack.c.bf16 %v1526, %v1526
    %v1528 = vpack.c.bf16 %v1479, %v1479
    %1529 = vmatpush.bf16.msra.mxu0 %v441
    %1530 = vmatpush.bf16.msra.mxu0 %v440
    %1531 = vmatpush.bf16.msra.mxu0 %v439
    %1532 = vmatpush.bf16.msra.mxu0 %v438
    %1533 = vmatpush.bf16.msra.mxu0 %v437
    %1534 = vmatpush.bf16.msra.mxu0 %v436
    %1535 = vmatpush.bf16.msra.mxu0 %v435
    %1536 = vmatpush.bf16.msra.mxu0 %v434
    %1537 = vmatmul.bf16.gmra.mxu0 %v1527
    %v1538 = vpop.f32.mrf.mxu0
    %v1539 = vadd.f32 %v369, %v1538
    %v1540 = vpop.f32.mrf.mxu0
    %1541 = vdwg.mxu0
    %1542 = vmatpush.bf16.msra.mxu0 %v449
    %1543 = vmatpush.bf16.msra.mxu0 %v448
    %1544 = vmatpush.bf16.msra.mxu0 %v447
    %1545 = vmatpush.bf16.msra.mxu0 %v446
    %1546 = vmatpush.bf16.msra.mxu0 %v445
    %1547 = vmatpush.bf16.msra.mxu0 %v444
    %1548 = vmatpush.bf16.msra.mxu0 %v443
    %1549 = vmatpush.bf16.msra.mxu0 %v442
    %1550 = vmatmul.bf16.gmra.mxu0 %v1528
    %v1551 = vpop.f32.mrf.mxu0
    %v1552 = vadd.f32 %v1539, %v1551
    %v1553 = vpop.f32.mrf.mxu0
    %1554 = vdwg.mxu0
    %v1555 = vtanh.pop %v1552
    %s1556 = scalar_lea.vmem [#allocation13], 112
    %1557 = vst [vmem:[%s1556] sm:$0xff] %v1555
    %s1558 = scalar_lea.vmem [#allocation5], 120
    %v1559 = vld [vmem:[%s1558] sm:$0xff]
    %1560 = vmatpush.bf16.msra.mxu0 %v217
    %1561 = vmatpush.bf16.msra.mxu0 %v216
    %1562 = vmatpush.bf16.msra.mxu0 %v215
    %1563 = vmatpush.bf16.msra.mxu0 %v214
    %1564 = vmatpush.bf16.msra.mxu0 %v213
    %1565 = vmatpush.bf16.msra.mxu0 %v212
    %1566 = vmatpush.bf16.msra.mxu0 %v211
    %1567 = vmatpush.bf16.msra.mxu0 %v210
    %1568 = vmatmul.bf16.gmra.mxu0 %v1499
    %v1569 = vpop.f32.mrf.mxu0
    %v1570 = vadd.f32 0.0, %v1569
    %v1571 = vpop.f32.mrf.mxu0
    %1572 = vdwg.mxu0
    %v1573 = vadd.f32 %v1559, %v1570
    %v1574 = vtanh.pop %v1573
    %v1575 = vpack.c.bf16 %v1574, %v1574
    %1576 = vmatpush.bf16.msra.mxu0 %v315
    %1577 = vmatpush.bf16.msra.mxu0 %v314
    %1578 = vmatpush.bf16.msra.mxu0 %v313
    %1579 = vmatpush.bf16.msra.mxu0 %v312
    %1580 = vmatpush.bf16.msra.mxu0 %v311
    %1581 = vmatpush.bf16.msra.mxu0 %v310
    %1582 = vmatpush.bf16.msra.mxu0 %v309
    %1583 = vmatpush.bf16.msra.mxu0 %v308
    %1584 = vmatmul.bf16.gmra.mxu0 %v1575
    %v1585 = vpop.f32.mrf.mxu0
    %v1586 = vadd.f32 %v243, %v1585
    %v1587 = vpop.f32.mrf.mxu0
    %1588 = vdwg.mxu0
    %1589 = vmatpush.bf16.msra.mxu0 %v323
    %1590 = vmatpush.bf16.msra.mxu0 %v322
    %1591 = vmatpush.bf16.msra.mxu0 %v321
    %1592 = vmatpush.bf16.msra.mxu0 %v320
    %1593 = vmatpush.bf16.msra.mxu0 %v319
    %1594 = vmatpush.bf16.msra.mxu0 %v318
    %1595 = vmatpush.bf16.msra.mxu0 %v317
    %1596 = vmatpush.bf16.msra.mxu0 %v316
    %1597 = vmatmul.bf16.gmra.mxu0 %v1527
    %v1598 = vpop.f32.mrf.mxu0
    %v1599 = vadd.f32 %v1586, %v1598
    %v1600 = vpop.f32.mrf.mxu0
    %1601 = vdwg.mxu0
    %v1602 = vtanh.pop %v1599
    %v1603 = vpack.c.bf16 %v1602, %v1602
    %v1604 = vpack.c.bf16 %v1555, %v1555
    %1605 = vmatpush.bf16.msra.mxu0 %v441
    %1606 = vmatpush.bf16.msra.mxu0 %v440
    %1607 = vmatpush.bf16.msra.mxu0 %v439
    %1608 = vmatpush.bf16.msra.mxu0 %v438
    %1609 = vmatpush.bf16.msra.mxu0 %v437
    %1610 = vmatpush.bf16.msra.mxu0 %v436
    %1611 = vmatpush.bf16.msra.mxu0 %v435
    %1612 = vmatpush.bf16.msra.mxu0 %v434
    %1613 = vmatmul.bf16.gmra.mxu0 %v1603
    %v1614 = vpop.f32.mrf.mxu0
    %v1615 = vadd.f32 %v369, %v1614
    %v1616 = vpop.f32.mrf.mxu0
    %1617 = vdwg.mxu0
    %1618 = vmatpush.bf16.msra.mxu0 %v449
    %1619 = vmatpush.bf16.msra.mxu0 %v448
    %1620 = vmatpush.bf16.msra.mxu0 %v447
    %1621 = vmatpush.bf16.msra.mxu0 %v446
    %1622 = vmatpush.bf16.msra.mxu0 %v445
    %1623 = vmatpush.bf16.msra.mxu0 %v444
    %1624 = vmatpush.bf16.msra.mxu0 %v443
    %1625 = vmatpush.bf16.msra.mxu0 %v442
    %1626 = vmatmul.bf16.gmra.mxu0 %v1604
    %v1627 = vpop.f32.mrf.mxu0
    %v1628 = vadd.f32 %v1615, %v1627
    %v1629 = vpop.f32.mrf.mxu0
    %1630 = vdwg.mxu0
    %v1631 = vtanh.pop %v1628
    %s1632 = scalar_lea.vmem [#allocation13], 120
    %1633 = vst [vmem:[%s1632] sm:$0xff] %v1631
    %1634 = vst [vmem:[#allocation2] sm:$0xff] %v1574
    %1635 = vst [vmem:[#allocation3] sm:$0xff] %v1602
    %1636 = vst [vmem:[#allocation4] sm:$0xff] %v1631
    // Predicated region
    $region42: #{tpu_custom_call.1} parent=1 // pred_check
      _
    $region43: #{tpu_custom_call.1} parent=1 // pred_check_branch
      %1638 = sbr.rel (0) target = $region45
    $region44: #{tpu_custom_call.1} parent=1 // pred_region
      %1640 = vsyncadd [#allocation7], 0
      %s1641 = sshll.u32 [#allocation13], 4
      %s1642 = int_to_ptr.vmem [resolvable:$true] %s1641
      %s1643 = sshll.u32 %s5, 4
      %s1644 = int_to_ptr.hbm [resolvable:$true] %s1643
      %1649 = dma.vmem_to_hbm [thread:$0]  %s1642, 2048, %s1644, [#allocation7], 128, 128, 8
    $region45: #{tpu_custom_call.1} parent=1 // pred_fallthru
      _
    // Predicated region
    $region46: #{tpu_custom_call.1} parent=1 // pred_check
      _
    $region47: #{tpu_custom_call.1} parent=1 // pred_check_branch
      %1651 = sbr.rel (0) target = $region49
    $region48: #{tpu_custom_call.1} parent=1 // pred_region
      %1653 = dma.done [#allocation7], 2048
    $region49: #{tpu_custom_call.1} parent=1 // pred_fallthru
      _
    %1654 = vsyncpa [#allocation6], 1
    %1655 = vsyncpa [#allocation9], 1
    %1656 = vsyncpa [#allocation12], 1
    %1657 = vsyncpa [#allocation7], 1

</llo_original>
